<compile_context>
chip_gen: v7x
topology: tpu7x:2x2x1
jax: 0.10.0
libtpu: 0.0.40
codegen_flags: <defaults>
</compile_context>

<pallas_src>
import functools

import jax
import jax.numpy as jnp
from jax.experimental import pallas as pl
from jax.experimental.pallas import tpu as pltpu


def _round_up(x, m):
    return ((x + m - 1) // m) * m


def _rel_layer_kernel(adj_ref, xu_ref, xv_ref, wcat_ref, skipw_ref, skipb_ref,
                      o_ref, acc_ref, *, num_relations, f_out_pad, apply_relu):
    """One RelGraphConv layer.  Grid = (row tiles v [parallel], contraction u [arbitrary])."""
    u = pl.program_id(1)
    n_u = pl.num_programs(1)

    # One fused projection matmul for all relations: (tile_u, f_in) @ (f_in, R*f_out).
    y_all = jnp.dot(xu_ref[...], wcat_ref[...],
                    preferred_element_type=jnp.float32).astype(jnp.bfloat16)

    # Partial aggregation sum_r adj_s[r] @ Y_r for this (v, u) tile, accumulated in
    # registers; the f32 scratch accumulator is read/written once per grid step.
    part = jnp.dot(adj_ref[0], y_all[:, :f_out_pad],
                   preferred_element_type=jnp.float32)
    for r in range(1, num_relations):
        part = part + jnp.dot(adj_ref[r],
                              y_all[:, r * f_out_pad:(r + 1) * f_out_pad],
                              preferred_element_type=jnp.float32)

    @pl.when(u == 0)
    def _():
        skip = jnp.dot(xv_ref[...], skipw_ref[...],
                       preferred_element_type=jnp.float32) + skipb_ref[...]
        acc_ref[...] = skip + part

    @pl.when(u > 0)
    def _():
        acc_ref[...] = acc_ref[...] + part

    @pl.when(u == n_u - 1)
    def _():
        out = acc_ref[...]
        if apply_relu:
            out = jnp.maximum(out, 0.0)
        o_ref[...] = out.astype(o_ref.dtype)   # single lane-dense store per output tile


def rel_graph_conv(adj_s, x, w_cat, skip_w, skip_b, *, num_relations, f_out_pad,
                   apply_relu, out_dtype, tile_v, tile_u):
    """adj_s: [R, n_pad, n_pad] bf16 (pre-scaled by 1/in_degree, zero-padded).
    x: [n_pad, f_in_pad] bf16.  w_cat/skip_w bf16, skip_b f32 (all padded)."""
    R = num_relations
    n_pad = adj_s.shape[1]
    f_in_pad = x.shape[1]
    n_v = n_pad // tile_v
    n_u = n_pad // tile_u

    kernel = functools.partial(_rel_layer_kernel, num_relations=R,
                               f_out_pad=f_out_pad, apply_relu=apply_relu)

    # Deeper prefetch on the two operands whose block index changes every step,
    # but only when the contraction axis actually pipelines.
    if n_u > 2:
        adj_spec = pl.BlockSpec((R, tile_v, tile_u), lambda v, u: (0, v, u),
                                pipeline_mode=pl.Buffered(3))
        xu_spec = pl.BlockSpec((tile_u, f_in_pad), lambda v, u: (u, 0),
                               pipeline_mode=pl.Buffered(3))
        n_buf = 3
    else:
        adj_spec = pl.BlockSpec((R, tile_v, tile_u), lambda v, u: (0, v, u))
        xu_spec = pl.BlockSpec((tile_u, f_in_pad), lambda v, u: (u, 0))
        n_buf = 2

    out_itemsize = jnp.dtype(out_dtype).itemsize
    est = (n_buf * (R * tile_v * tile_u * 2 + tile_u * f_in_pad * 2)
           + 2 * (tile_v * f_in_pad * 2            # xv (skip rows)
                  + f_in_pad * R * f_out_pad * 2   # w_cat (resident)
                  + f_in_pad * f_out_pad * 2       # skip_w (resident)
                  + f_out_pad * 4                  # skip_b
                  + tile_v * f_out_pad * out_itemsize)  # output tile
           + tile_v * f_out_pad * 4)               # f32 accumulator scratch
    # Leave headroom for compiler-internal scratch; 48 MiB is safe on v5e/v6e/v7x.
    vmem_limit = int(min(max(est + (8 << 20), 32 << 20), 48 << 20))

    return pl.pallas_call(
        kernel,
        out_shape=jax.ShapeDtypeStruct((n_pad, f_out_pad), out_dtype),
        grid_spec=pltpu.PrefetchScalarGridSpec(
            num_scalar_prefetch=0,
            grid=(n_v, n_u),                                         # reduction innermost
            in_specs=[
                adj_spec,                                            # adj_s[:, v, u]
                xu_spec,                                             # X rows (contraction)
                pl.BlockSpec((tile_v, f_in_pad), lambda v, u: (v, 0)),       # X rows (skip)
                pl.BlockSpec((f_in_pad, R * f_out_pad), lambda v, u: (0, 0)),  # w_cat (resident)
                pl.BlockSpec((f_in_pad, f_out_pad), lambda v, u: (0, 0)),    # skip_w (resident)
                pl.BlockSpec((1, f_out_pad), lambda v, u: (0, 0)),           # skip_b (resident)
            ],
            out_specs=pl.BlockSpec((tile_v, f_out_pad), lambda v, u: (v, 0)),
            scratch_shapes=[pltpu.VMEM((tile_v, f_out_pad), jnp.float32)],
        ),
        compiler_params=pltpu.CompilerParams(
            dimension_semantics=("parallel", "arbitrary"),
            vmem_limit_bytes=vmem_limit,
        ),
    )(adj_s, x, x, w_cat, skip_w, skip_b)


def rgcn_forward(adj, invdeg, node_feats, layer_params):
    """Stack of RelGraphConv layers; relu on all but the last layer."""
    R, N, _ = adj.shape
    n_pad = _round_up(N, 128)

    # Contraction (u) tile: largest of {512,256,128} dividing n_pad.
    tile_u = next(t for t in (512, 256, 128) if n_pad % t == 0)
    # Row (v) tile: keep >= 2 row tiles so the "parallel" axis can shard across
    # both TensorCores on v7x (no effect on single-TC v5e/v6e).
    tile_v = tile_u
    while n_pad // tile_v < 2 and tile_v > 16:
        tile_v //= 2

    # --- one-time preprocessing shared by every layer -----------------------
    # Fold the mean-aggregation denominator into the adjacency (commutes with the
    # right-multiply by W_r), zero-pad the node dim and quantize the dominant
    # streamed operand to bf16.
    adj_s = adj * invdeg.reshape(1, N, 1)
    adj_s = jnp.pad(adj_s, ((0, 0), (0, n_pad - N), (0, n_pad - N)))
    adj_s = adj_s.astype(jnp.bfloat16)

    h = node_feats
    n_layers = len(layer_params)
    for i, p in enumerate(layer_params):
        # Logical feature sizes come from THIS layer's weights (fixes the padding
        # bug where h.shape[1] — already padded — was used and weights stayed unpadded).
        f_in = p["rel_w"].shape[1]
        f_out = p["rel_w"].shape[2]
        f_in_pad = _round_up(max(f_in, h.shape[1]), 128)
        f_out_pad = _round_up(f_out, 128)

        if h.shape == (n_pad, f_in_pad) and h.dtype == jnp.bfloat16:
            x = h                                    # hidden layers: already padded bf16
        else:
            x = jnp.pad(h.astype(jnp.float32),
                        ((0, n_pad - h.shape[0]), (0, f_in_pad - h.shape[1])))
            x = x.astype(jnp.bfloat16)

        rel_w = jnp.pad(p["rel_w"],
                        ((0, 0), (0, f_in_pad - f_in), (0, f_out_pad - f_out)))
        # Concatenate relations lane-wise: w_cat[:, r*f_out_pad:(r+1)*f_out_pad] = W_r.
        w_cat = jnp.transpose(rel_w, (1, 0, 2)).reshape(f_in_pad, R * f_out_pad)
        w_cat = w_cat.astype(jnp.bfloat16)
        skip_w = jnp.pad(p["skip_w"], ((0, f_in_pad - f_in),
                                       (0, f_out_pad - f_out))).astype(jnp.bfloat16)
        skip_b = jnp.pad(p["skip_b"], ((0, 0), (0, f_out_pad - f_out))).astype(jnp.float32)

        last = (i == n_layers - 1)
        h = rel_graph_conv(adj_s, x, w_cat, skip_w, skip_b,
                           num_relations=R, f_out_pad=f_out_pad,
                           apply_relu=not last,
                           out_dtype=jnp.float32 if last else jnp.bfloat16,
                           tile_v=tile_v, tile_u=tile_u)
        # Hidden h is (n_pad, f_out_pad) bf16; padded feature columns are exactly
        # zero (zero weights / zero bias, relu(0)=0), so it feeds the next layer as-is.

    out_feats = layer_params[-1]["rel_w"].shape[2]
    return h[:N, :out_feats]


def rgcn_reference(adj, invdeg, node_feats, layer_params):
    """Pure-JAX reference in the original (non-reassociated) order.  Mirrors the
    kernel's operand quantization (bf16 adj/x/weights, f32 accumulation)."""
    def q(a):
        return a.astype(jnp.bfloat16).astype(jnp.float32)

    a16 = q(adj * invdeg.reshape(1, -1, 1))
    h = node_feats
    n_layers = len(layer_params)
    for i, p in enumerate(layer_params):
        x16 = q(h)
        w16 = q(p["rel_w"])
        sw16 = q(p["skip_w"])
        agg = jnp.einsum("rvu,uf->rvf", a16, x16)
        rel = jnp.einsum("rvf,rfh->vh", agg, w16)
        h_new = rel + x16 @ sw16 + p["skip_b"]
        if i < n_layers - 1:
            h_new = jnp.maximum(h_new, 0.0)
        h = h_new
    return h


def make_params(key, num_layers, in_feats, hidden_feats, out_feats, num_relations):
    """Deterministic (kaiming-uniform-ish) parameter init per RelGraphConv layer."""
    dims = [in_feats] + [hidden_feats] * (num_layers - 1) + [out_feats]
    params = []
    for l in range(num_layers):
        f_in, f_out = dims[l], dims[l + 1]
        key, k_rel, k_w, k_b = jax.random.split(key, 4)
        bound = 1.0 / jnp.sqrt(jnp.float32(f_in))
        rel_w = jax.random.uniform(k_rel, (num_relations, f_in, f_out),
                                   jnp.float32, -bound, bound)
        skip_w = jax.random.uniform(k_w, (f_in, f_out), jnp.float32, -bound, bound)
        skip_b = jax.random.uniform(k_b, (1, f_out), jnp.float32, -bound, bound)
        params.append({"rel_w": rel_w, "skip_w": skip_w, "skip_b": skip_b})
    return params


if __name__ == "__main__":
    # Small synthetic "graph": N nodes, R relations, shared edge structure.
    N = 64
    IN_FEATS = 16
    HIDDEN = 32
    OUT_FEATS = 8
    NUM_REL = 3
    NUM_LAYERS = 3

    key = jax.random.PRNGKey(0)
    key, k_mask, k_wts, k_feat, k_param = jax.random.split(key, 5)

    # Random edge structure (no self loops), shared across relations.
    mask = (jax.random.uniform(k_mask, (N, N)) < 0.15).astype(jnp.float32)
    mask = mask * (1.0 - jnp.eye(N, dtype=jnp.float32))

    # Per-relation prior edge weights.
    rel_edge_w = jax.random.uniform(k_wts, (NUM_REL, N, N), jnp.float32, 0.1, 1.0)
    adj = rel_edge_w * mask[None, :, :]          # adj[r, v, u] = weight(u -> v)

    indeg = mask.sum(axis=1)                     # in-degree of node v
    invdeg = jnp.where(indeg > 0, 1.0 / indeg, 0.0).reshape(N, 1).astype(jnp.float32)

    node_feats = jax.random.normal(k_feat, (N, IN_FEATS), jnp.float32)

    params = make_params(k_param, NUM_LAYERS, IN_FEATS, HIDDEN, OUT_FEATS, NUM_REL)

    out = rgcn_forward(adj, invdeg, node_feats, params)
    out = jax.block_until_ready(out)

    ref = jax.block_until_ready(rgcn_reference(adj, invdeg, node_feats, params))
    assert out.shape == (N, OUT_FEATS)
    max_err = float(jnp.max(jnp.abs(out - ref)))
    assert jnp.allclose(out, ref, atol=3e-2, rtol=3e-2), f"mismatch vs reference: {max_err}"

    print("KERNEL_OK")
</pallas_src>

<mosaic_0001>
module attributes {stable_mosaic.version = 11 : i64} {
  func.func @_rel_layer_kernel(%arg0: i32, %arg1: i32, %arg2: memref<3x64x128xbf16, #tpu.memory_space<vmem>>, %arg3: memref<128x128xbf16, #tpu.memory_space<vmem>>, %arg4: memref<64x128xbf16, #tpu.memory_space<vmem>>, %arg5: memref<128x384xbf16, #tpu.memory_space<vmem>>, %arg6: memref<128x128xbf16, #tpu.memory_space<vmem>>, %arg7: memref<1x128xf32, #tpu.memory_space<vmem>>, %arg8: memref<64x128xbf16, #tpu.memory_space<vmem>>, %arg9: memref<64x128xf32, #tpu.memory_space<vmem>>) attributes {dimension_semantics = [#tpu.dimension_semantics<parallel>, #tpu.dimension_semantics<arbitrary>], iteration_bounds = array<i64: 2, 1>, scalar_prefetch = 0 : i64, scratch_operands = 1 : i64, tpu.core_type = #tpu.core_type<tc>, window_params = [{transform_indices = @transform_0, window_bounds = array<i64: 3, 64, 128>}, {transform_indices = @transform_1, window_bounds = array<i64: 128, 128>}, {transform_indices = @transform_2, window_bounds = array<i64: 64, 128>}, {pipeline_mode = #tpu.pipeline_mode<synchronous>, transform_indices = @transform_3, window_bounds = array<i64: 128, 384>}, {pipeline_mode = #tpu.pipeline_mode<synchronous>, transform_indices = @transform_4, window_bounds = array<i64: 128, 128>}, {pipeline_mode = #tpu.pipeline_mode<synchronous>, transform_indices = @transform_5, window_bounds = array<i64: 1, 128>}, {transform_indices = @transform_6, window_bounds = array<i64: 64, 128>}]} {
    %c0 = arith.constant 0 : index
    %c0_0 = arith.constant 0 : index
    %0 = vector.load %arg3[%c0, %c0_0] : memref<128x128xbf16, #tpu.memory_space<vmem>>, vector<128x128xbf16>
    %c0_1 = arith.constant 0 : index
    %c0_2 = arith.constant 0 : index
    %1 = vector.load %arg5[%c0_1, %c0_2] : memref<128x384xbf16, #tpu.memory_space<vmem>>, vector<128x384xbf16>
    %cst = arith.constant dense<0.000000e+00> : vector<128x384xf32>
    %2 = tpu.matmul %0, %1, %cst {dimension_numbers = #tpu.dot_dimension_numbers<[1], [0], [0], [1], [0, 0, 1, 1], [], []>} : vector<128x128xbf16>, vector<128x384xbf16>, vector<128x384xf32> -> vector<128x384xf32>
    %3 = arith.truncf %2 : vector<128x384xf32> to vector<128x384xbf16>
    %c0_3 = arith.constant 0 : index
    %c0_4 = arith.constant 0 : index
    %c0_5 = arith.constant 0 : index
    %4 = vector.load %arg2[%c0_3, %c0_4, %c0_5] : memref<3x64x128xbf16, #tpu.memory_space<vmem>>, vector<1x64x128xbf16>
    %5 = vector.shape_cast %4 : vector<1x64x128xbf16> to vector<64x128xbf16>
    %6 = vector.extract_strided_slice %3 {offsets = [0, 0], sizes = [128, 128], strides = [1, 1]} : vector<128x384xbf16> to vector<128x128xbf16>
    %cst_6 = arith.constant dense<0.000000e+00> : vector<64x128xf32>
    %7 = tpu.matmul %5, %6, %cst_6 {dimension_numbers = #tpu.dot_dimension_numbers<[1], [0], [0], [1], [0, 0, 1, 1], [], []>} : vector<64x128xbf16>, vector<128x128xbf16>, vector<64x128xf32> -> vector<64x128xf32>
    %c1 = arith.constant 1 : index
    %c0_7 = arith.constant 0 : index
    %c0_8 = arith.constant 0 : index
    %8 = vector.load %arg2[%c1, %c0_7, %c0_8] : memref<3x64x128xbf16, #tpu.memory_space<vmem>>, vector<1x64x128xbf16>
    %9 = vector.shape_cast %8 : vector<1x64x128xbf16> to vector<64x128xbf16>
    %10 = vector.extract_strided_slice %3 {offsets = [0, 128], sizes = [128, 128], strides = [1, 1]} : vector<128x384xbf16> to vector<128x128xbf16>
    %cst_9 = arith.constant dense<0.000000e+00> : vector<64x128xf32>
    %11 = tpu.matmul %9, %10, %cst_9 {dimension_numbers = #tpu.dot_dimension_numbers<[1], [0], [0], [1], [0, 0, 1, 1], [], []>} : vector<64x128xbf16>, vector<128x128xbf16>, vector<64x128xf32> -> vector<64x128xf32>
    %12 = arith.addf %7, %11 : vector<64x128xf32>
    %c2 = arith.constant 2 : index
    %c0_10 = arith.constant 0 : index
    %c0_11 = arith.constant 0 : index
    %13 = vector.load %arg2[%c2, %c0_10, %c0_11] : memref<3x64x128xbf16, #tpu.memory_space<vmem>>, vector<1x64x128xbf16>
    %14 = vector.shape_cast %13 : vector<1x64x128xbf16> to vector<64x128xbf16>
    %15 = vector.extract_strided_slice %3 {offsets = [0, 256], sizes = [128, 128], strides = [1, 1]} : vector<128x384xbf16> to vector<128x128xbf16>
    %cst_12 = arith.constant dense<0.000000e+00> : vector<64x128xf32>
    %16 = tpu.matmul %14, %15, %cst_12 {dimension_numbers = #tpu.dot_dimension_numbers<[1], [0], [0], [1], [0, 0, 1, 1], [], []>} : vector<64x128xbf16>, vector<128x128xbf16>, vector<64x128xf32> -> vector<64x128xf32>
    %17 = arith.addf %12, %16 : vector<64x128xf32>
    %c0_i32 = arith.constant 0 : i32
    %18 = arith.cmpi eq, %arg1, %c0_i32 : i32
    %19 = arith.extui %18 : i1 to i32
    %c0_i32_13 = arith.constant 0 : i32
    %20 = arith.cmpi ne, %19, %c0_i32_13 : i32
    scf.if %20 {
      %c0_18 = arith.constant 0 : index
      %c0_19 = arith.constant 0 : index
      %27 = vector.load %arg4[%c0_18, %c0_19] : memref<64x128xbf16, #tpu.memory_space<vmem>>, vector<64x128xbf16>
      %c0_20 = arith.constant 0 : index
      %c0_21 = arith.constant 0 : index
      %28 = vector.load %arg6[%c0_20, %c0_21] : memref<128x128xbf16, #tpu.memory_space<vmem>>, vector<128x128xbf16>
      %cst_22 = arith.constant dense<0.000000e+00> : vector<64x128xf32>
      %29 = tpu.matmul %27, %28, %cst_22 {dimension_numbers = #tpu.dot_dimension_numbers<[1], [0], [0], [1], [0, 0, 1, 1], [], []>} : vector<64x128xbf16>, vector<128x128xbf16>, vector<64x128xf32> -> vector<64x128xf32>
      %c0_23 = arith.constant 0 : index
      %c0_24 = arith.constant 0 : index
      %30 = vector.load %arg7[%c0_23, %c0_24] : memref<1x128xf32, #tpu.memory_space<vmem>>, vector<1x128xf32>
      %31 = vector.broadcast %30 : vector<1x128xf32> to vector<64x128xf32>
      %32 = arith.addf %29, %31 : vector<64x128xf32>
      %33 = arith.addf %32, %17 : vector<64x128xf32>
      %c0_25 = arith.constant 0 : index
      %c0_26 = arith.constant 0 : index
      %34 = vector.load %arg9[%c0_25, %c0_26] : memref<64x128xf32, #tpu.memory_space<vmem>>, vector<64x128xf32>
      tpu.vector_store %arg9[%c0_25, %c0_26], %33 {strides = array<i32>} : memref<64x128xf32, #tpu.memory_space<vmem>>, vector<64x128xf32>,
    } else {
    }
    %c0_i32_14 = arith.constant 0 : i32
    %21 = arith.cmpi sgt, %arg1, %c0_i32_14 : i32
    %22 = arith.extui %21 : i1 to i32
    %c0_i32_15 = arith.constant 0 : i32
    %23 = arith.cmpi ne, %22, %c0_i32_15 : i32
    scf.if %23 {
      %c0_18 = arith.constant 0 : index
      %c0_19 = arith.constant 0 : index
      %27 = vector.load %arg9[%c0_18, %c0_19] : memref<64x128xf32, #tpu.memory_space<vmem>>, vector<64x128xf32>
      %28 = arith.addf %27, %17 : vector<64x128xf32>
      %c0_20 = arith.constant 0 : index
      %c0_21 = arith.constant 0 : index
      %29 = vector.load %arg9[%c0_20, %c0_21] : memref<64x128xf32, #tpu.memory_space<vmem>>, vector<64x128xf32>
      tpu.vector_store %arg9[%c0_20, %c0_21], %28 {strides = array<i32>} : memref<64x128xf32, #tpu.memory_space<vmem>>, vector<64x128xf32>,
    } else {
    }
    %c0_i32_16 = arith.constant 0 : i32
    %24 = arith.cmpi eq, %arg1, %c0_i32_16 : i32
    %25 = arith.extui %24 : i1 to i32
    %c0_i32_17 = arith.constant 0 : i32
    %26 = arith.cmpi ne, %25, %c0_i32_17 : i32
    scf.if %26 {
      %c0_18 = arith.constant 0 : index
      %c0_19 = arith.constant 0 : index
      %27 = vector.load %arg9[%c0_18, %c0_19] : memref<64x128xf32, #tpu.memory_space<vmem>>, vector<64x128xf32>
      %cst_20 = arith.constant 0.000000e+00 : f32
      %28 = vector.broadcast %cst_20 : f32 to vector<64x128xf32>
      %29 = arith.maximumf %27, %28 : vector<64x128xf32>
      %30 = arith.truncf %29 : vector<64x128xf32> to vector<64x128xbf16>
      %c0_21 = arith.constant 0 : index
      %c0_22 = arith.constant 0 : index
      %31 = vector.load %arg8[%c0_21, %c0_22] : memref<64x128xbf16, #tpu.memory_space<vmem>>, vector<64x128xbf16>
      tpu.vector_store %arg8[%c0_21, %c0_22], %30 {strides = array<i32>} : memref<64x128xbf16, #tpu.memory_space<vmem>>, vector<64x128xbf16>,
    } else {
    }
    return
  }
  func.func @transform_0(%arg0: i32, %arg1: i32) -> (i32, i32, i32) {
    %c0_i32 = arith.constant 0 : i32
    %c0_i32_0 = arith.constant 0 : i32
    return %c0_i32, %arg0, %arg1 : i32, i32, i32
  }
  func.func @transform_1(%arg0: i32, %arg1: i32) -> (i32, i32) {
    %c0_i32 = arith.constant 0 : i32
    %c0_i32_0 = arith.constant 0 : i32
    return %arg1, %c0_i32 : i32, i32
  }
  func.func @transform_2(%arg0: i32, %arg1: i32) -> (i32, i32) {
    %c0_i32 = arith.constant 0 : i32
    %c0_i32_0 = arith.constant 0 : i32
    return %arg0, %c0_i32 : i32, i32
  }
  func.func @transform_3(%arg0: i32, %arg1: i32) -> (i32, i32) {
    %c0_i32 = arith.constant 0 : i32
    %c0_i32_0 = arith.constant 0 : i32
    %c0_i32_1 = arith.constant 0 : i32
    return %c0_i32, %c0_i32_0 : i32, i32
  }
  func.func @transform_4(%arg0: i32, %arg1: i32) -> (i32, i32) {
    %c0_i32 = arith.constant 0 : i32
    %c0_i32_0 = arith.constant 0 : i32
    %c0_i32_1 = arith.constant 0 : i32
    return %c0_i32, %c0_i32_0 : i32, i32
  }
  func.func @transform_5(%arg0: i32, %arg1: i32) -> (i32, i32) {
    %c0_i32 = arith.constant 0 : i32
    %c0_i32_0 = arith.constant 0 : i32
    %c0_i32_1 = arith.constant 0 : i32
    return %c0_i32, %c0_i32_0 : i32, i32
  }
  func.func @transform_6(%arg0: i32, %arg1: i32) -> (i32, i32) {
    %c0_i32 = arith.constant 0 : i32
    %c0_i32_0 = arith.constant 0 : i32
    return %arg0, %c0_i32 : i32, i32
  }
}

</mosaic_0001>

<llo_original>
// kernel: tpu_custom_call.1
$region0: #{tpu_custom_call.1}
  #allocation0 [shape = 'u32[]', space=smem, size = 0x4, offset = 0x4, fixed_abs, tag = 'smem constant byte address 0x4 - core index']
  #allocation1 [shape = 'u32[144,128]{1,0:T(1,128)}', space=vmem, size = 0x12000, scoped, tag = 'internal scratch']
  #allocation2 [shape = 'f32[64,128]{1,0:T(8,128)}', space=vmem, size = 0x8000, scoped, tag = 'scratch operand']
  #allocation13 [shape = 's32[]', space=sflag, size = 0x4, offset = 0, fixed_abs, tag = 'sflag constant byte address 0x0 - dummy sync flag']
  %s0 = inlined_call_operand.hbm [shape: bf16[3,128,128], index: 0, kind: input, shape index: {}]
  %s1 = inlined_call_operand.hbm [shape: bf16[128,128], index: 1, kind: input, shape index: {}]
  %s2 = inlined_call_operand.hbm [shape: bf16[128,128], index: 2, kind: input, shape index: {}]
  %s3 = inlined_call_operand.hbm [shape: bf16[128,384], index: 3, kind: input, shape index: {}]
  %s4 = inlined_call_operand.hbm [shape: bf16[128,128], index: 4, kind: input, shape index: {}]
  %s5 = inlined_call_operand.vmem [shape: f32[1,128], index: 5, kind: input, shape index: {}]
  %s6 = inlined_call_operand.hbm [shape: bf16[128,128], index: 6, kind: output, shape index: {}]
  %s7 = sld [smem:[#allocation0]]
  $region89: #{tpu_custom_call.1} parent=0
    _
  %s9 = ssub.s32 1, %s7
  %s10 = scalar_select 0, %s9, %s7
  $region1: #{tpu_custom_call.1} parent=0
    #allocation3 [shape = 'u8[98304]{0}', space=vmem, size = 0x18000, scoped, tag = 'input window, operand 0']
    #allocation4 [shape = 's32[2]{0}', space=sflag, size = 0x8, scoped, tag = 'scoped memory for tpu_custom_call.1']
    #allocation5 [shape = 's32[2]{0}', space=sflag, size = 0x8, scoped, tag = 'scoped memory for tpu_custom_call.1']
    #allocation6 [shape = 'u8[32768]{0}', space=vmem, size = 0x8000, scoped, tag = 'input window, operand 1, single buffered']
    #allocation7 [shape = 's32[1]{0}', space=sflag, size = 0x4, scoped, tag = 'scoped memory for tpu_custom_call.1']
    #allocation8 [shape = 'u8[32768]{0}', space=vmem, size = 0x8000, scoped, tag = 'input window, operand 2']
    #allocation9 [shape = 'u8[98304]{0}', space=vmem, size = 0x18000, scoped, tag = 'input window, operand 3, single buffered']
    #allocation10 [shape = 'u8[32768]{0}', space=vmem, size = 0x8000, scoped, tag = 'input window, operand 4, single buffered']
    #allocation11 [shape = 's32[1]{0}', space=sflag, size = 0x4, scoped, tag = 'scoped memory for tpu_custom_call.1']
    #allocation12 [shape = 'u8[32768]{0}', space=vmem, size = 0x8000, scoped, tag = 'output window, operand 0']
    %11 = vsyncpa [#allocation4], 0
    %s12 = scalar_lea.sflag [#allocation4], 1
    %13 = vsyncpa %s12, 0
    %14 = vsyncpa [#allocation7], 0
    %15 = vsyncpa [#allocation11], 0
    %16 = vsyncpa [#allocation5], 0
    %s17 = scalar_lea.sflag [#allocation5], 1
    %18 = vsyncpa %s17, 0
    loop: start=0, step=1, limit=4
    $region2: #{tpu_custom_call.1} parent=1 // loop_pre_header
      _
    $region3: #{tpu_custom_call.1} parent=1 // loop_header
      %s20 = sphi 0, %s24
      %p21 = scmp.ge.s32.totalorder %s20, 4
      %s27 = sphi 0, %s39
      %s28 = sphi 0, %s35
      %s29 = sphi 0, %s27
      %s30 = sphi 0, %s28
      %s31 = sphi 0, %s29
      %s32 = sphi 0, %s30
      %s44 = sphi 0, %s46
      %s47 = sphi 0, %s44
      %s48 = sphi 0, %s47
      %s64 = sphi 0, %s48
      %s70 = sphi 0, %s72
      %s73 = sphi 0, %s70
      %s74 = sphi 0, %s73
      %s90 = sphi 0, %s74
      %s96 = sphi 0, %s98
      %s99 = sphi 0, %s96
      %s100 = sphi 0, %s99
      %s116 = sphi 0, %s100
      %s120 = sphi 0, %s120
      %s122 = sphi 0, %s120
      %s123 = sphi 0, %s122
      %s137 = sphi 0, %s123
      %s141 = sphi 0, %s141
      %s143 = sphi 0, %s141
      %s144 = sphi 0, %s143
      %s158 = sphi 0, %s144
      %s162 = sphi 0, %s162
      %s164 = sphi 0, %s162
      %s165 = sphi 0, %s164
      %s179 = sphi 0, %s165
      %s185 = sphi 0, %s187
      %s188 = sphi 0, %s185
      %s189 = sphi 0, %s188
      %s205 = sphi 0, %s189
    $region4: #{tpu_custom_call.1} parent=1 // loop_header_branch
      %23 = sbr.rel (%p21) target = $region8
    $region5: #{tpu_custom_call.1} parent=1 // loop_body
      %s25 = ssub.s32 %s20, 1
      %s26 = ssub.s32 %s20, 2
      %s33 = sadd.s32 1, %s28
      %p34 = scmp.ge.s32.totalorder %s33, 1
      %s35 = scalar_select %p34, 0, %s33
      %s36 = sadd.s32 1, %s27
      %s37 = scalar_select %p34, %s36, %s27
      %p38 = scmp.ge.s32.totalorder %s37, 2
      %s39 = scalar_select %p38, 0, %s37
      %s40 = ssub.s32 %s27, %s39
      %s41 = ssub.s32 %s28, %s35
      %s42 = sor.u32 %s40, %s41
      %p43 = scmp.eq.s32.totalorder %s42, 0
      %s45 = sadd.s32 %s44, 1
      %s46 = scalar_select %p43, %s44, %s45
      %p49 = pneg %p43
      %p50 = scmp.eq.s32.totalorder %s20, 1
      %p51 = por %p49, %p50
      %p52 = scmp.ne.s32.totalorder %s44, %s47
      %p53 = scmp.eq.s32.totalorder %s20, 0
      %p54 = por %p52, %p53
      %p55 = scmp.ne.s32.totalorder %s44, %s47
      %p56 = scmp.eq.s32.totalorder %s25, 1
      %p57 = por %p55, %p56
      %p58 = scmp.ne.s32.totalorder %s47, %s48
      %p59 = scmp.eq.s32.totalorder %s25, 0
      %p60 = por %p58, %p59
      %p61 = scmp.ne.s32.totalorder %s47, %s48
      %p62 = scmp.eq.s32.totalorder %s26, 1
      %p63 = por %p61, %p62
      %p65 = scmp.ne.s32.totalorder %s48, %s64
      %p66 = scmp.eq.s32.totalorder %s26, 0
      %p67 = por %p65, %p66
      %s68 = ssub.s32 %s28, %s35
      %p69 = scmp.eq.s32.totalorder %s68, 0
      %s71 = sadd.s32 %s70, 1
      %s72 = scalar_select %p69, %s70, %s71
      %p75 = pneg %p69
      %p76 = scmp.eq.s32.totalorder %s20, 1
      %p77 = por %p75, %p76
      %p78 = scmp.ne.s32.totalorder %s70, %s73
      %p79 = scmp.eq.s32.totalorder %s20, 0
      %p80 = por %p78, %p79
      %p81 = scmp.ne.s32.totalorder %s70, %s73
      %p82 = scmp.eq.s32.totalorder %s25, 1
      %p83 = por %p81, %p82
      %p84 = scmp.ne.s32.totalorder %s73, %s74
      %p85 = scmp.eq.s32.totalorder %s25, 0
      %p86 = por %p84, %p85
      %p87 = scmp.ne.s32.totalorder %s73, %s74
      %p88 = scmp.eq.s32.totalorder %s26, 1
      %p89 = por %p87, %p88
      %p91 = scmp.ne.s32.totalorder %s74, %s90
      %p92 = scmp.eq.s32.totalorder %s26, 0
      %p93 = por %p91, %p92
      %s94 = ssub.s32 %s27, %s39
      %p95 = scmp.eq.s32.totalorder %s94, 0
      %s97 = sadd.s32 %s96, 1
      %s98 = scalar_select %p95, %s96, %s97
      %p101 = pneg %p95
      %p102 = scmp.eq.s32.totalorder %s20, 1
      %p103 = por %p101, %p102
      %p104 = scmp.ne.s32.totalorder %s96, %s99
      %p105 = scmp.eq.s32.totalorder %s20, 0
      %p106 = por %p104, %p105
      %p107 = scmp.ne.s32.totalorder %s96, %s99
      %p108 = scmp.eq.s32.totalorder %s25, 1
      %p109 = por %p107, %p108
      %p110 = scmp.ne.s32.totalorder %s99, %s100
      %p111 = scmp.eq.s32.totalorder %s25, 0
      %p112 = por %p110, %p111
      %p113 = scmp.ne.s32.totalorder %s99, %s100
      %p114 = scmp.eq.s32.totalorder %s26, 1
      %p115 = por %p113, %p114
      %p117 = scmp.ne.s32.totalorder %s100, %s116
      %p118 = scmp.eq.s32.totalorder %s26, 0
      %p119 = por %p117, %p118
      %s121 = sadd.s32 %s120, 1
      %p124 = scmp.eq.s32.totalorder %s20, 1
      %p125 = scmp.ne.s32.totalorder %s120, %s122
      %p126 = scmp.eq.s32.totalorder %s20, 0
      %p127 = por %p125, %p126
      %p128 = scmp.ne.s32.totalorder %s120, %s122
      %p129 = scmp.eq.s32.totalorder %s25, 1
      %p130 = por %p128, %p129
      %p131 = scmp.ne.s32.totalorder %s122, %s123
      %p132 = scmp.eq.s32.totalorder %s25, 0
      %p133 = por %p131, %p132
      %p134 = scmp.ne.s32.totalorder %s122, %s123
      %p135 = scmp.eq.s32.totalorder %s26, 1
      %p136 = por %p134, %p135
      %p138 = scmp.ne.s32.totalorder %s123, %s137
      %p139 = scmp.eq.s32.totalorder %s26, 0
      %p140 = por %p138, %p139
      %s142 = sadd.s32 %s141, 1
      %p145 = scmp.eq.s32.totalorder %s20, 1
      %p146 = scmp.ne.s32.totalorder %s141, %s143
      %p147 = scmp.eq.s32.totalorder %s20, 0
      %p148 = por %p146, %p147
      %p149 = scmp.ne.s32.totalorder %s141, %s143
      %p150 = scmp.eq.s32.totalorder %s25, 1
      %p151 = por %p149, %p150
      %p152 = scmp.ne.s32.totalorder %s143, %s144
      %p153 = scmp.eq.s32.totalorder %s25, 0
      %p154 = por %p152, %p153
      %p155 = scmp.ne.s32.totalorder %s143, %s144
      %p156 = scmp.eq.s32.totalorder %s26, 1
      %p157 = por %p155, %p156
      %p159 = scmp.ne.s32.totalorder %s144, %s158
      %p160 = scmp.eq.s32.totalorder %s26, 0
      %p161 = por %p159, %p160
      %s163 = sadd.s32 %s162, 1
      %p166 = scmp.eq.s32.totalorder %s20, 1
      %p167 = scmp.ne.s32.totalorder %s162, %s164
      %p168 = scmp.eq.s32.totalorder %s20, 0
      %p169 = por %p167, %p168
      %p170 = scmp.ne.s32.totalorder %s162, %s164
      %p171 = scmp.eq.s32.totalorder %s25, 1
      %p172 = por %p170, %p171
      %p173 = scmp.ne.s32.totalorder %s164, %s165
      %p174 = scmp.eq.s32.totalorder %s25, 0
      %p175 = por %p173, %p174
      %p176 = scmp.ne.s32.totalorder %s164, %s165
      %p177 = scmp.eq.s32.totalorder %s26, 1
      %p178 = por %p176, %p177
      %p180 = scmp.ne.s32.totalorder %s165, %s179
      %p181 = scmp.eq.s32.totalorder %s26, 0
      %p182 = por %p180, %p181
      %s183 = ssub.s32 %s27, %s39
      %p184 = scmp.eq.s32.totalorder %s183, 0
      %s186 = sadd.s32 %s185, 1
      %s187 = scalar_select %p184, %s185, %s186
      %p190 = pneg %p184
      %p191 = scmp.eq.s32.totalorder %s20, 1
      %p192 = por %p190, %p191
      %p193 = scmp.ne.s32.totalorder %s185, %s188
      %p194 = scmp.eq.s32.totalorder %s20, 0
      %p195 = por %p193, %p194
      %p196 = scmp.ne.s32.totalorder %s185, %s188
      %p197 = scmp.eq.s32.totalorder %s25, 1
      %p198 = por %p196, %p197
      %p199 = scmp.ne.s32.totalorder %s188, %s189
      %p200 = scmp.eq.s32.totalorder %s25, 0
      %p201 = por %p199, %p200
      %p202 = scmp.ne.s32.totalorder %s188, %s189
      %p203 = scmp.eq.s32.totalorder %s26, 1
      %p204 = por %p202, %p203
      %p206 = scmp.ne.s32.totalorder %s189, %s205
      %p207 = scmp.eq.s32.totalorder %s26, 0
      %p208 = por %p206, %p207
      %p209 = scmp.le.s32.totalorder 1, %s20
      %p210 = scmp.lt.s32.totalorder %s20, 3
      %p211 = pnand %p209, %p210
      %p212 = pneg %p211
      // Predicated region
      $region9: #{tpu_custom_call.1} parent=5 // pred_check
        _
      $region10: #{tpu_custom_call.1} parent=5 // pred_check_branch
        %214 = sbr.rel (%p211) target = $region12
      $region11: #{tpu_custom_call.1} parent=5 // pred_region
        %s215 = ssub.s32 %s20, 1
        // Predicated region
        $region13: #{tpu_custom_call.1} parent=11 // pred_check
          %p216 = pneg %p86
        $region14: #{tpu_custom_call.1} parent=11 // pred_check_branch
          %218 = sbr.rel (%p216) target = $region16
        $region15: #{tpu_custom_call.1} parent=11 // pred_region
          %s219 = smul.u32 16, %s30
          %s221 = ssub.s32 1024, 1024
          %222 = vsyncadd [#allocation7], %s221
          %s223 = smul.addr %s219, 64
          %s224 = scalar_lea.hbm %s1, %s223
          %s225 = sshll.u32 [#allocation6], 4
          %s226 = int_to_ptr.vmem [resolvable:$true] %s225
          %231 = dma.hbm_to_vmem [thread:$0]  %s224, 1024, %s226, [#allocation7], 64, 64, 4
        $region16: #{tpu_custom_call.1} parent=11 // pred_fallthru
          _
        // Predicated region
        $region17: #{tpu_custom_call.1} parent=11 // pred_check
          %p232 = pneg %p133
        $region18: #{tpu_custom_call.1} parent=11 // pred_check_branch
          %234 = sbr.rel (%p232) target = $region20
        $region19: #{tpu_custom_call.1} parent=11 // pred_region
          %s236 = ssub.s32 3072, 3072
          %237 = vsyncadd [#allocation7], %s236
          %s238 = sshll.u32 [#allocation9], 4
          %s239 = int_to_ptr.vmem [resolvable:$true] %s238
          %244 = dma.hbm_to_vmem [thread:$0]  %s3, 3072, %s239, [#allocation7], 192, 192, 12
        $region20: #{tpu_custom_call.1} parent=11 // pred_fallthru
          _
        // Predicated region
        $region21: #{tpu_custom_call.1} parent=11 // pred_check
          %p245 = pneg %p154
        $region22: #{tpu_custom_call.1} parent=11 // pred_check_branch
          %247 = sbr.rel (%p245) target = $region24
        $region23: #{tpu_custom_call.1} parent=11 // pred_region
          %s249 = ssub.s32 1024, 1024
          %250 = vsyncadd [#allocation11], %s249
          %s251 = sshll.u32 [#allocation10], 4
          %s252 = int_to_ptr.vmem [resolvable:$true] %s251
          %257 = dma.hbm_to_vmem [thread:$0]  %s4, 1024, %s252, [#allocation11], 64, 64, 4
        $region24: #{tpu_custom_call.1} parent=11 // pred_fallthru
          _
        // Predicated region
        $region25: #{tpu_custom_call.1} parent=11 // pred_check
          %p258 = pneg %p175
        $region26: #{tpu_custom_call.1} parent=11 // pred_check_branch
          %260 = sbr.rel (%p258) target = $region28
        $region27: #{tpu_custom_call.1} parent=11 // pred_region
          _
        $region28: #{tpu_custom_call.1} parent=11 // pred_fallthru
          _
      $region12: #{tpu_custom_call.1} parent=5 // pred_fallthru
        _
      %p261 = scmp.lt.s32.totalorder %s20, 2
      // Predicated region
      $region29: #{tpu_custom_call.1} parent=5 // pred_check
        %p262 = pneg %p261
      $region30: #{tpu_custom_call.1} parent=5 // pred_check_branch
        %264 = sbr.rel (%p262) target = $region32
      $region31: #{tpu_custom_call.1} parent=5 // pred_region
        // Predicated region
        $region33: #{tpu_custom_call.1} parent=31 // pred_check
          %p265 = pneg %p54
        $region34: #{tpu_custom_call.1} parent=31 // pred_check_branch
          %267 = sbr.rel (%p265) target = $region36
        $region35: #{tpu_custom_call.1} parent=31 // pred_region
          #allocation14 [shape = 'u32[6]{0}', space=smem, size = 0x18, scoped, tag = 'DMA stride descriptor']
          %s268 = sand.u32 %s20, 1
          %s269 = scalar_lea.sflag [#allocation4], %s268
          %s270 = sand.u32 %s44, 1
          %s271 = smul.addr %s270, 96
          %s272 = scalar_lea.vmem [#allocation3], %s271
          %s273 = smul.u32 8, %s27
          %s275 = ssub.s32 1536, 1536
          %276 = vsyncadd %s269, %s275
          %s277 = sadd.s32 %s28, %s273
          %s278 = smul.addr %s277, 64
          %s279 = scalar_lea.hbm %s0, %s278
          %s281 = sshll.u32 1, 14
          %s282 = sxor.u32 4294967295, %s281
          %s284 = sld [smem:[#allocation0]]
          %s285 = sadd.s32 2, %s284
          %s287 = sshll.u32 7, 26
          %s288 = sxor.u32 4294967295, %s287
          %s289 = sand.u32 0, %s288
          %s290 = sshll.u32 %s285, 26
          %s291 = sor.u32 %s289, %s290
          %s292 = sshll.u32 %s272, 4
          %s293 = int_to_ptr.vmem [resolvable:$true] %s292
          %299 = sst [smem:[#allocation14]] 1024
          %s300 = scalar_lea.smem [#allocation14], 1
          %301 = sst [smem:[%s300]] 512
          %s302 = scalar_lea.smem [#allocation14], 2
          %303 = sst [smem:[%s302]] 8
          %s304 = scalar_lea.smem [#allocation14], 3
          %305 = sst [smem:[%s304]] 64
          %s306 = scalar_lea.smem [#allocation14], 4
          %307 = sst [smem:[%s306]] 64
          %s308 = scalar_lea.smem [#allocation14], 5
          %309 = sst [smem:[%s308]] 4
          %311 = dma.general %s279, 1536, %s293, %s269, [#allocation13], [#allocation14], %s291, 0
        $region36: #{tpu_custom_call.1} parent=31 // pred_fallthru
          _
        // Predicated region
        $region37: #{tpu_custom_call.1} parent=31 // pred_check
          %p312 = pneg %p106
        $region38: #{tpu_custom_call.1} parent=31 // pred_check_branch
          %314 = sbr.rel (%p312) target = $region40
        $region39: #{tpu_custom_call.1} parent=31 // pred_region
          %s315 = sand.u32 %s20, 1
          %s316 = scalar_lea.sflag [#allocation4], %s315
          %s317 = sand.u32 %s96, 1
          %s318 = smul.addr %s317, 32
          %s319 = scalar_lea.vmem [#allocation8], %s318
          %s320 = smul.u32 8, %s27
          %s322 = ssub.s32 512, 512
          %323 = vsyncadd %s316, %s322
          %s324 = smul.addr %s320, 64
          %s325 = scalar_lea.hbm %s2, %s324
          %s326 = sshll.u32 %s319, 4
          %s327 = int_to_ptr.vmem [resolvable:$true] %s326
          %332 = dma.hbm_to_vmem [thread:$0]  %s325, 512, %s327, %s316, 64, 64, 4
        $region40: #{tpu_custom_call.1} parent=31 // pred_fallthru
          _
      $region32: #{tpu_custom_call.1} parent=5 // pred_fallthru
        _
      %p333 = scmp.le.s32.totalorder 1, %s20
      %p334 = scmp.lt.s32.totalorder %s20, 3
      %p335 = pnand %p333, %p334
      %p336 = pneg %p335
      // Predicated region
      $region41: #{tpu_custom_call.1} parent=5 // pred_check
        _
      $region42: #{tpu_custom_call.1} parent=5 // pred_check_branch
        %338 = sbr.rel (%p335) target = $region44
      $region43: #{tpu_custom_call.1} parent=5 // pred_region
        %s339 = ssub.s32 %s20, 1
        %s340 = sand.u32 %s25, 1
        %s341 = scalar_lea.sflag [#allocation4], %s340
        %s342 = sand.u32 %s47, 1
        %s343 = smul.addr %s342, 96
        %s344 = scalar_lea.vmem [#allocation3], %s343
        // Predicated region
        $region45: #{tpu_custom_call.1} parent=43 // pred_check
          %p345 = pneg %p60
        $region46: #{tpu_custom_call.1} parent=43 // pred_check_branch
          %347 = sbr.rel (%p345) target = $region48
        $region47: #{tpu_custom_call.1} parent=43 // pred_region
          %348 = dma.done %s341, 1536
        $region48: #{tpu_custom_call.1} parent=43 // pred_fallthru
          _
        // Predicated region
        $region49: #{tpu_custom_call.1} parent=43 // pred_check
          %p349 = pneg %p86
        $region50: #{tpu_custom_call.1} parent=43 // pred_check_branch
          %351 = sbr.rel (%p349) target = $region52
        $region51: #{tpu_custom_call.1} parent=43 // pred_region
          %352 = dma.done [#allocation7], 1024
        $region52: #{tpu_custom_call.1} parent=43 // pred_fallthru
          _
        %s353 = sand.u32 %s25, 1
        %s354 = scalar_lea.sflag [#allocation4], %s353
        %s355 = sand.u32 %s99, 1
        %s356 = smul.addr %s355, 32
        %s357 = scalar_lea.vmem [#allocation8], %s356
        // Predicated region
        $region53: #{tpu_custom_call.1} parent=43 // pred_check
          %p358 = pneg %p112
        $region54: #{tpu_custom_call.1} parent=43 // pred_check_branch
          %360 = sbr.rel (%p358) target = $region56
        $region55: #{tpu_custom_call.1} parent=43 // pred_region
          %361 = dma.done %s354, 512
        $region56: #{tpu_custom_call.1} parent=43 // pred_fallthru
          _
        // Predicated region
        $region57: #{tpu_custom_call.1} parent=43 // pred_check
          %p362 = pneg %p133
        $region58: #{tpu_custom_call.1} parent=43 // pred_check_branch
          %364 = sbr.rel (%p362) target = $region60
        $region59: #{tpu_custom_call.1} parent=43 // pred_region
          %365 = dma.done [#allocation7], 3072
        $region60: #{tpu_custom_call.1} parent=43 // pred_fallthru
          _
        // Predicated region
        $region61: #{tpu_custom_call.1} parent=43 // pred_check
          %p366 = pneg %p154
        $region62: #{tpu_custom_call.1} parent=43 // pred_check_branch
          %368 = sbr.rel (%p366) target = $region64
        $region63: #{tpu_custom_call.1} parent=43 // pred_region
          %369 = dma.done [#allocation11], 1024
        $region64: #{tpu_custom_call.1} parent=43 // pred_fallthru
          _
        %s370 = sand.u32 %s25, 1
        %s371 = scalar_lea.sflag [#allocation4], %s370
        %s372 = sand.u32 %s47, 1
        %s373 = smul.addr %s372, 96
        %s374 = scalar_lea.vmem [#allocation3], %s373
        %p375 = pneg %p60
        %p376 = pneg %p57
        %p377 = pneg %p86
        %p378 = pneg %p83
        %s379 = sand.u32 %s25, 1
        %s380 = scalar_lea.sflag [#allocation4], %s379
        %s381 = sand.u32 %s99, 1
        %s382 = smul.addr %s381, 32
        %s383 = scalar_lea.vmem [#allocation8], %s382
        %p384 = pneg %p112
        %p385 = pneg %p109
        %p386 = pneg %p133
        %p387 = pneg %p130
        %p388 = pneg %p154
        %p389 = pneg %p151
        %p390 = pneg %p175
        %p391 = pneg %p172
        %p392 = pneg %p201
        %p393 = pneg %p198
        %s394 = sand.u32 %s188, 1
        %s395 = scalar_lea.sflag [#allocation5], %s394
        %s396 = sand.u32 %s188, 1
        %s397 = smul.addr %s396, 32
        %s398 = scalar_lea.vmem [#allocation12], %s397
        %s399 = smul.u32 8, %s29
        %s400 = smul.u32 16, %s30
        %s401 = smul.u32 8, %s29
        %s402 = smul.u32 8, %s29
        %v404 = vld [vmem:[#allocation6] sm:$0xf]
        %v405 = vld [vmem:[#allocation6 + $0x4] sm:$0xf]
        %v406 = vld [vmem:[#allocation6 + $0x8] sm:$0xf]
        %v407 = vld [vmem:[#allocation6 + $0xc] sm:$0xf]
        %v408 = vld [vmem:[#allocation6 + $0x10] sm:$0xf]
        %v409 = vld [vmem:[#allocation6 + $0x14] sm:$0xf]
        %v410 = vld [vmem:[#allocation6 + $0x18] sm:$0xf]
        %v411 = vld [vmem:[#allocation6 + $0x1c] sm:$0xf]
        %v412 = vld [vmem:[#allocation6 + $0x20] sm:$0xf]
        %v413 = vld [vmem:[#allocation6 + $0x24] sm:$0xf]
        %v414 = vld [vmem:[#allocation6 + $0x28] sm:$0xf]
        %v415 = vld [vmem:[#allocation6 + $0x2c] sm:$0xf]
        %v416 = vld [vmem:[#allocation6 + $0x30] sm:$0xf]
        %v417 = vld [vmem:[#allocation6 + $0x34] sm:$0xf]
        %v418 = vld [vmem:[#allocation6 + $0x38] sm:$0xf]
        %v419 = vld [vmem:[#allocation6 + $0x3c] sm:$0xf]
        %v420 = vld [vmem:[#allocation9] sm:$0xff]
        %v421 = vld [vmem:[#allocation9 + $0x8] sm:$0xf]
        %v422 = vld [vmem:[#allocation9 + $0xc] sm:$0xff]
        %v423 = vld [vmem:[#allocation9 + $0x14] sm:$0xf]
        %v424 = vld [vmem:[#allocation9 + $0x18] sm:$0xff]
        %v425 = vld [vmem:[#allocation9 + $0x20] sm:$0xf]
        %v426 = vld [vmem:[#allocation9 + $0x24] sm:$0xff]
        %v427 = vld [vmem:[#allocation9 + $0x2c] sm:$0xf]
        %v428 = vld [vmem:[#allocation9 + $0x30] sm:$0xff]
        %v429 = vld [vmem:[#allocation9 + $0x38] sm:$0xf]
        %v430 = vld [vmem:[#allocation9 + $0x3c] sm:$0xff]
        %v431 = vld [vmem:[#allocation9 + $0x44] sm:$0xf]
        %v432 = vld [vmem:[#allocation9 + $0x48] sm:$0xff]
        %v433 = vld [vmem:[#allocation9 + $0x50] sm:$0xf]
        %v434 = vld [vmem:[#allocation9 + $0x54] sm:$0xff]
        %v435 = vld [vmem:[#allocation9 + $0x5c] sm:$0xf]
        %v436 = vld [vmem:[#allocation9 + $0x60] sm:$0xff]
        %v437 = vld [vmem:[#allocation9 + $0x68] sm:$0xf]
        %v438 = vld [vmem:[#allocation9 + $0x6c] sm:$0xff]
        %v439 = vld [vmem:[#allocation9 + $0x74] sm:$0xf]
        %v440 = vld [vmem:[#allocation9 + $0x78] sm:$0xff]
        %v441 = vld [vmem:[#allocation9 + $0x80] sm:$0xf]
        %v442 = vld [vmem:[#allocation9 + $0x84] sm:$0xff]
        %v443 = vld [vmem:[#allocation9 + $0x8c] sm:$0xf]
        %v444 = vld [vmem:[#allocation9 + $0x90] sm:$0xff]
        %v445 = vld [vmem:[#allocation9 + $0x98] sm:$0xf]
        %v446 = vld [vmem:[#allocation9 + $0x9c] sm:$0xff]
        %v447 = vld [vmem:[#allocation9 + $0xa4] sm:$0xf]
        %v448 = vld [vmem:[#allocation9 + $0xa8] sm:$0xff]
        %v449 = vld [vmem:[#allocation9 + $0xb0] sm:$0xf]
        %v450 = vld [vmem:[#allocation9 + $0xb4] sm:$0xff]
        %v451 = vld [vmem:[#allocation9 + $0xbc] sm:$0xf]
        %v468 = vunpack.c.l.b16 %v404
        %v469 = vunpack.c.l.b16 %v405
        %v470 = vunpack.c.l.b16 %v406
        %v471 = vunpack.c.l.b16 %v407
        %v472 = vunpack.c.l.b16 %v408
        %v473 = vunpack.c.l.b16 %v409
        %v474 = vunpack.c.l.b16 %v410
        %v475 = vunpack.c.l.b16 %v411
        %v476 = vunpack.c.l.b16 %v412
        %v477 = vunpack.c.l.b16 %v413
        %v478 = vunpack.c.l.b16 %v414
        %v479 = vunpack.c.l.b16 %v415
        %v480 = vunpack.c.l.b16 %v416
        %v481 = vunpack.c.l.b16 %v417
        %v482 = vunpack.c.l.b16 %v418
        %v483 = vunpack.c.l.b16 %v419
        %v484 = vpack.c.b16 %v469, %v468
        %v485 = vpack.c.b16 %v471, %v470
        %v486 = vpack.c.b16 %v473, %v472
        %v487 = vpack.c.b16 %v475, %v474
        %v488 = vpack.c.b16 %v477, %v476
        %v489 = vpack.c.b16 %v479, %v478
        %v490 = vpack.c.b16 %v481, %v480
        %v491 = vpack.c.b16 %v483, %v482
        %v532 = vunpack.c.l.b16 %v420
        %v533 = vunpack.c.h.b16 %v420
        %v534 = vunpack.c.l.b16 %v421
        %v535 = vunpack.c.l.b16 %v422
        %v536 = vunpack.c.h.b16 %v422
        %v537 = vunpack.c.l.b16 %v423
        %v538 = vunpack.c.l.b16 %v424
        %v539 = vunpack.c.h.b16 %v424
        %v540 = vunpack.c.l.b16 %v425
        %v541 = vunpack.c.l.b16 %v426
        %v542 = vunpack.c.h.b16 %v426
        %v543 = vunpack.c.l.b16 %v427
        %v544 = vunpack.c.l.b16 %v428
        %v545 = vunpack.c.h.b16 %v428
        %v546 = vunpack.c.l.b16 %v429
        %v547 = vunpack.c.l.b16 %v430
        %v548 = vunpack.c.h.b16 %v430
        %v549 = vunpack.c.l.b16 %v431
        %v550 = vunpack.c.l.b16 %v432
        %v551 = vunpack.c.h.b16 %v432
        %v552 = vunpack.c.l.b16 %v433
        %v553 = vunpack.c.l.b16 %v434
        %v554 = vunpack.c.h.b16 %v434
        %v555 = vunpack.c.l.b16 %v435
        %v556 = vunpack.c.l.b16 %v436
        %v557 = vunpack.c.h.b16 %v436
        %v558 = vunpack.c.l.b16 %v437
        %v559 = vunpack.c.l.b16 %v438
        %v560 = vunpack.c.h.b16 %v438
        %v561 = vunpack.c.l.b16 %v439
        %v562 = vunpack.c.l.b16 %v440
        %v563 = vunpack.c.h.b16 %v440
        %v564 = vunpack.c.l.b16 %v441
        %v565 = vunpack.c.l.b16 %v442
        %v566 = vunpack.c.h.b16 %v442
        %v567 = vunpack.c.l.b16 %v443
        %v568 = vunpack.c.l.b16 %v444
        %v569 = vunpack.c.h.b16 %v444
        %v570 = vunpack.c.l.b16 %v445
        %v571 = vunpack.c.l.b16 %v446
        %v572 = vunpack.c.h.b16 %v446
        %v573 = vunpack.c.l.b16 %v447
        %v574 = vunpack.c.l.b16 %v448
        %v575 = vunpack.c.h.b16 %v448
        %v576 = vunpack.c.l.b16 %v449
        %v577 = vunpack.c.l.b16 %v450
        %v578 = vunpack.c.h.b16 %v450
        %v579 = vunpack.c.l.b16 %v451
        %v580 = vpack.c.b16 %v535, %v532
        %v581 = vpack.c.b16 %v536, %v533
        %v582 = vpack.c.b16 %v537, %v534
        %v583 = vpack.c.b16 %v541, %v538
        %v584 = vpack.c.b16 %v542, %v539
        %v585 = vpack.c.b16 %v543, %v540
        %v586 = vpack.c.b16 %v547, %v544
        %v587 = vpack.c.b16 %v548, %v545
        %v588 = vpack.c.b16 %v549, %v546
        %v589 = vpack.c.b16 %v553, %v550
        %v590 = vpack.c.b16 %v554, %v551
        %v591 = vpack.c.b16 %v555, %v552
        %v592 = vpack.c.b16 %v559, %v556
        %v593 = vpack.c.b16 %v560, %v557
        %v594 = vpack.c.b16 %v561, %v558
        %v595 = vpack.c.b16 %v565, %v562
        %v596 = vpack.c.b16 %v566, %v563
        %v597 = vpack.c.b16 %v567, %v564
        %v598 = vpack.c.b16 %v571, %v568
        %v599 = vpack.c.b16 %v572, %v569
        %v600 = vpack.c.b16 %v573, %v570
        %v601 = vpack.c.b16 %v577, %v574
        %v602 = vpack.c.b16 %v578, %v575
        %v603 = vpack.c.b16 %v579, %v576
        %628 = vmatprep.subr.bf16.mxu0 %v581
        %629 = vmatpush1.bf16.msra.mxu0 %v580
        %630 = vmatprep.subr.bf16.mxu0 %v584
        %631 = vmatpush1.bf16.msra.mxu0 %v583
        %632 = vmatprep.subr.bf16.mxu0 %v587
        %633 = vmatpush1.bf16.msra.mxu0 %v586
        %634 = vmatprep.subr.bf16.mxu0 %v590
        %635 = vmatpush1.bf16.msra.mxu0 %v589
        %636 = vmatprep.subr.bf16.mxu0 %v593
        %637 = vmatpush1.bf16.msra.mxu0 %v592
        %638 = vmatprep.subr.bf16.mxu0 %v596
        %639 = vmatpush1.bf16.msra.mxu0 %v595
        %640 = vmatprep.subr.bf16.mxu0 %v599
        %641 = vmatpush1.bf16.msra.mxu0 %v598
        %642 = vmatprep.subr.bf16.mxu0 %v602
        %643 = vmatpush1.bf16.msra.mxu0 %v601
        %644 = vmatprep.subr.bf16.mxu0 0
        %645 = vmatpush1.bf16.msra.mxu0 0
        %646 = vmatprep.subr.bf16.mxu0 0
        %647 = vmatpush1.bf16.msra.mxu0 0
        %648 = vmatprep.subr.bf16.mxu0 0
        %649 = vmatpush1.bf16.msra.mxu0 0
        %650 = vmatprep.subr.bf16.mxu0 0
        %651 = vmatpush1.bf16.msra.mxu0 0
        %652 = vmatprep.subr.bf16.mxu0 0
        %653 = vmatpush1.bf16.msra.mxu0 0
        %654 = vmatprep.subr.bf16.mxu0 0
        %655 = vmatpush1.bf16.msra.mxu0 0
        %656 = vmatprep.subr.bf16.mxu0 0
        %657 = vmatpush1.bf16.msra.mxu0 0
        %658 = vmatprep.subr.bf16.mxu0 0
        %659 = vmatpush1.bf16.msra.mxu0 0
        %660 = vmatprep.mubr.bf16.mxu0 0
        %661 = vmatmul.mubr.bf16.gmra.mrb[0].mxu0 %v484
        %v662 = vpop.f32.mrb[0].mxu0
        %v663 = vadd.f32 0.0, %v662
        %v664 = vpop.f32.mrb[0].mxu0
        %v665 = vadd.f32 0.0, %v664
        %v666 = vpop.f32.mrb[0].mxu0
        %v667 = vadd.f32 0.0, %v666
        %v668 = vpop.f32.mrb[0].mxu0
        %v669 = vadd.f32 0.0, %v668
        %670 = vmatprep.mubr.bf16.mxu0 0
        %671 = vmatmul.mubr.bf16.gmra.mrb[0].mxu0 %v485
        %v672 = vpop.f32.mrb[0].mxu0
        %v673 = vadd.f32 0.0, %v672
        %v674 = vpop.f32.mrb[0].mxu0
        %v675 = vadd.f32 0.0, %v674
        %v676 = vpop.f32.mrb[0].mxu0
        %v677 = vadd.f32 0.0, %v676
        %v678 = vpop.f32.mrb[0].mxu0
        %v679 = vadd.f32 0.0, %v678
        %680 = vmatprep.mubr.bf16.mxu0 0
        %681 = vmatmul.mubr.bf16.gmra.mrb[0].mxu0 %v486
        %v682 = vpop.f32.mrb[0].mxu0
        %v683 = vadd.f32 0.0, %v682
        %v684 = vpop.f32.mrb[0].mxu0
        %v685 = vadd.f32 0.0, %v684
        %v686 = vpop.f32.mrb[0].mxu0
        %v687 = vadd.f32 0.0, %v686
        %v688 = vpop.f32.mrb[0].mxu0
        %v689 = vadd.f32 0.0, %v688
        %690 = vmatprep.mubr.bf16.mxu0 0
        %691 = vmatmul.mubr.bf16.gmra.mrb[0].mxu0 %v487
        %v692 = vpop.f32.mrb[0].mxu0
        %v693 = vadd.f32 0.0, %v692
        %v694 = vpop.f32.mrb[0].mxu0
        %v695 = vadd.f32 0.0, %v694
        %v696 = vpop.f32.mrb[0].mxu0
        %v697 = vadd.f32 0.0, %v696
        %v698 = vpop.f32.mrb[0].mxu0
        %v699 = vadd.f32 0.0, %v698
        %700 = vmatprep.mubr.bf16.mxu0 0
        %701 = vmatmul.mubr.bf16.gmra.mrb[0].mxu0 %v488
        %v702 = vpop.f32.mrb[0].mxu0
        %v703 = vadd.f32 0.0, %v702
        %v704 = vpop.f32.mrb[0].mxu0
        %v705 = vadd.f32 0.0, %v704
        %v706 = vpop.f32.mrb[0].mxu0
        %v707 = vadd.f32 0.0, %v706
        %v708 = vpop.f32.mrb[0].mxu0
        %v709 = vadd.f32 0.0, %v708
        %710 = vmatprep.mubr.bf16.mxu0 0
        %711 = vmatmul.mubr.bf16.gmra.mrb[0].mxu0 %v489
        %v712 = vpop.f32.mrb[0].mxu0
        %v713 = vadd.f32 0.0, %v712
        %v714 = vpop.f32.mrb[0].mxu0
        %v715 = vadd.f32 0.0, %v714
        %v716 = vpop.f32.mrb[0].mxu0
        %v717 = vadd.f32 0.0, %v716
        %v718 = vpop.f32.mrb[0].mxu0
        %v719 = vadd.f32 0.0, %v718
        %720 = vmatprep.mubr.bf16.mxu0 0
        %721 = vmatmul.mubr.bf16.gmra.mrb[0].mxu0 %v490
        %v722 = vpop.f32.mrb[0].mxu0
        %v723 = vadd.f32 0.0, %v722
        %v724 = vpop.f32.mrb[0].mxu0
        %v725 = vadd.f32 0.0, %v724
        %v726 = vpop.f32.mrb[0].mxu0
        %v727 = vadd.f32 0.0, %v726
        %v728 = vpop.f32.mrb[0].mxu0
        %v729 = vadd.f32 0.0, %v728
        %730 = vmatprep.mubr.bf16.mxu0 0
        %731 = vmatmul.mubr.bf16.gmra.mrb[0].mxu0 %v491
        %v732 = vpop.f32.mrb[0].mxu0
        %v733 = vadd.f32 0.0, %v732
        %v734 = vpop.f32.mrb[0].mxu0
        %v735 = vadd.f32 0.0, %v734
        %v736 = vpop.f32.mrb[0].mxu0
        %v737 = vadd.f32 0.0, %v736
        %v738 = vpop.f32.mrb[0].mxu0
        %v739 = vadd.f32 0.0, %v738
        %740 = vdwg.mxu0
        %741 = vmatprep.subr.bf16.mxu0 0
        %742 = vmatpush1.bf16.msra.mxu0 %v582
        %743 = vmatprep.subr.bf16.mxu0 0
        %744 = vmatpush1.bf16.msra.mxu0 %v585
        %745 = vmatprep.subr.bf16.mxu0 0
        %746 = vmatpush1.bf16.msra.mxu0 %v588
        %747 = vmatprep.subr.bf16.mxu0 0
        %748 = vmatpush1.bf16.msra.mxu0 %v591
        %749 = vmatprep.subr.bf16.mxu0 0
        %750 = vmatpush1.bf16.msra.mxu0 %v594
        %751 = vmatprep.subr.bf16.mxu0 0
        %752 = vmatpush1.bf16.msra.mxu0 %v597
        %753 = vmatprep.subr.bf16.mxu0 0
        %754 = vmatpush1.bf16.msra.mxu0 %v600
        %755 = vmatprep.subr.bf16.mxu0 0
        %756 = vmatpush1.bf16.msra.mxu0 %v603
        %757 = vmatprep.subr.bf16.mxu0 0
        %758 = vmatpush1.bf16.msra.mxu0 0
        %759 = vmatprep.subr.bf16.mxu0 0
        %760 = vmatpush1.bf16.msra.mxu0 0
        %761 = vmatprep.subr.bf16.mxu0 0
        %762 = vmatpush1.bf16.msra.mxu0 0
        %763 = vmatprep.subr.bf16.mxu0 0
        %764 = vmatpush1.bf16.msra.mxu0 0
        %765 = vmatprep.subr.bf16.mxu0 0
        %766 = vmatpush1.bf16.msra.mxu0 0
        %767 = vmatprep.subr.bf16.mxu0 0
        %768 = vmatpush1.bf16.msra.mxu0 0
        %769 = vmatprep.subr.bf16.mxu0 0
        %770 = vmatpush1.bf16.msra.mxu0 0
        %771 = vmatprep.subr.bf16.mxu0 0
        %772 = vmatpush1.bf16.msra.mxu0 0
        %773 = vmatprep.mubr.bf16.mxu0 0
        %774 = vmatmul.mubr.bf16.gmra.mrb[0].mxu0 %v484
        %v775 = vpop.f32.mrb[0].mxu0
        %v776 = vadd.f32 0.0, %v775
        %v777 = vpop.f32.mrb[0].mxu0
        %v778 = vpop.f32.mrb[0].mxu0
        %v779 = vadd.f32 0.0, %v778
        %v780 = vpop.f32.mrb[0].mxu0
        %781 = vmatprep.mubr.bf16.mxu0 0
        %782 = vmatmul.mubr.bf16.gmra.mrb[0].mxu0 %v485
        %v783 = vpop.f32.mrb[0].mxu0
        %v784 = vadd.f32 0.0, %v783
        %v785 = vpop.f32.mrb[0].mxu0
        %v786 = vpop.f32.mrb[0].mxu0
        %v787 = vadd.f32 0.0, %v786
        %v788 = vpop.f32.mrb[0].mxu0
        %789 = vmatprep.mubr.bf16.mxu0 0
        %790 = vmatmul.mubr.bf16.gmra.mrb[0].mxu0 %v486
        %v791 = vpop.f32.mrb[0].mxu0
        %v792 = vadd.f32 0.0, %v791
        %v793 = vpop.f32.mrb[0].mxu0
        %v794 = vpop.f32.mrb[0].mxu0
        %v795 = vadd.f32 0.0, %v794
        %v796 = vpop.f32.mrb[0].mxu0
        %797 = vmatprep.mubr.bf16.mxu0 0
        %798 = vmatmul.mubr.bf16.gmra.mrb[0].mxu0 %v487
        %v799 = vpop.f32.mrb[0].mxu0
        %v800 = vadd.f32 0.0, %v799
        %v801 = vpop.f32.mrb[0].mxu0
        %v802 = vpop.f32.mrb[0].mxu0
        %v803 = vadd.f32 0.0, %v802
        %v804 = vpop.f32.mrb[0].mxu0
        %805 = vmatprep.mubr.bf16.mxu0 0
        %806 = vmatmul.mubr.bf16.gmra.mrb[0].mxu0 %v488
        %v807 = vpop.f32.mrb[0].mxu0
        %v808 = vadd.f32 0.0, %v807
        %v809 = vpop.f32.mrb[0].mxu0
        %v810 = vpop.f32.mrb[0].mxu0
        %v811 = vadd.f32 0.0, %v810
        %v812 = vpop.f32.mrb[0].mxu0
        %813 = vmatprep.mubr.bf16.mxu0 0
        %814 = vmatmul.mubr.bf16.gmra.mrb[0].mxu0 %v489
        %v815 = vpop.f32.mrb[0].mxu0
        %v816 = vadd.f32 0.0, %v815
        %v817 = vpop.f32.mrb[0].mxu0
        %v818 = vpop.f32.mrb[0].mxu0
        %v819 = vadd.f32 0.0, %v818
        %v820 = vpop.f32.mrb[0].mxu0
        %821 = vmatprep.mubr.bf16.mxu0 0
        %822 = vmatmul.mubr.bf16.gmra.mrb[0].mxu0 %v490
        %v823 = vpop.f32.mrb[0].mxu0
        %v824 = vadd.f32 0.0, %v823
        %v825 = vpop.f32.mrb[0].mxu0
        %v826 = vpop.f32.mrb[0].mxu0
        %v827 = vadd.f32 0.0, %v826
        %v828 = vpop.f32.mrb[0].mxu0
        %829 = vmatprep.mubr.bf16.mxu0 0
        %830 = vmatmul.mubr.bf16.gmra.mrb[0].mxu0 %v491
        %v831 = vpop.f32.mrb[0].mxu0
        %v832 = vadd.f32 0.0, %v831
        %v833 = vpop.f32.mrb[0].mxu0
        %v834 = vpop.f32.mrb[0].mxu0
        %v835 = vadd.f32 0.0, %v834
        %v836 = vpop.f32.mrb[0].mxu0
        %837 = vdwg.mxu0
        %v838 = vpack.c.bf16 %v667, %v663
        %v839 = vpack.c.bf16 %v669, %v665
        %v840 = vpack.c.bf16 %v779, %v776
        %v841 = vpack.c.bf16 %v677, %v673
        %v842 = vpack.c.bf16 %v679, %v675
        %v843 = vpack.c.bf16 %v787, %v784
        %v844 = vpack.c.bf16 %v687, %v683
        %v845 = vpack.c.bf16 %v689, %v685
        %v846 = vpack.c.bf16 %v795, %v792
        %v847 = vpack.c.bf16 %v697, %v693
        %v848 = vpack.c.bf16 %v699, %v695
        %v849 = vpack.c.bf16 %v803, %v800
        %v850 = vpack.c.bf16 %v707, %v703
        %v851 = vpack.c.bf16 %v709, %v705
        %v852 = vpack.c.bf16 %v811, %v808
        %v853 = vpack.c.bf16 %v717, %v713
        %v854 = vpack.c.bf16 %v719, %v715
        %v855 = vpack.c.bf16 %v819, %v816
        %v856 = vpack.c.bf16 %v727, %v723
        %v857 = vpack.c.bf16 %v729, %v725
        %v858 = vpack.c.bf16 %v827, %v824
        %v859 = vpack.c.bf16 %v737, %v733
        %v860 = vpack.c.bf16 %v739, %v735
        %v861 = vpack.c.bf16 %v835, %v832
        %v862 = vld [vmem:[%s344] sm:$0xf]
        %v863 = vld [vmem:[%s344 + $0x4] sm:$0xf]
        %v864 = vld [vmem:[%s344 + $0x8] sm:$0xf]
        %v865 = vld [vmem:[%s344 + $0xc] sm:$0xf]
        %v866 = vld [vmem:[%s344 + $0x10] sm:$0xf]
        %v867 = vld [vmem:[%s344 + $0x14] sm:$0xf]
        %v868 = vld [vmem:[%s344 + $0x18] sm:$0xf]
        %v869 = vld [vmem:[%s344 + $0x1c] sm:$0xf]
        %s870 = scalar_lea.vmem %s344, 32 [#allocation3]
        %v871 = vld [vmem:[%s870] sm:$0xf]
        %v872 = vld [vmem:[%s870 + $0x4] sm:$0xf]
        %v873 = vld [vmem:[%s870 + $0x8] sm:$0xf]
        %v874 = vld [vmem:[%s870 + $0xc] sm:$0xf]
        %v875 = vld [vmem:[%s870 + $0x10] sm:$0xf]
        %v876 = vld [vmem:[%s870 + $0x14] sm:$0xf]
        %v877 = vld [vmem:[%s870 + $0x18] sm:$0xf]
        %v878 = vld [vmem:[%s870 + $0x1c] sm:$0xf]
        %v887 = vunpack.c.l.b16 %v871
        %v888 = vunpack.c.l.b16 %v872
        %v889 = vunpack.c.l.b16 %v873
        %v890 = vunpack.c.l.b16 %v874
        %v891 = vunpack.c.l.b16 %v875
        %v892 = vunpack.c.l.b16 %v876
        %v893 = vunpack.c.l.b16 %v877
        %v894 = vunpack.c.l.b16 %v878
        %v895 = vpack.c.b16 %v888, %v887
        %v896 = vpack.c.b16 %v890, %v889
        %v897 = vpack.c.b16 %v892, %v891
        %v898 = vpack.c.b16 %v894, %v893
        %903 = vmatprep.subr.bf16.mxu0 0
        %904 = vmatpush1.bf16.msra.mxu0 %v839
        %905 = vmatprep.subr.bf16.mxu0 0
        %906 = vmatpush1.bf16.msra.mxu0 %v842
        %907 = vmatprep.subr.bf16.mxu0 0
        %908 = vmatpush1.bf16.msra.mxu0 %v845
        %909 = vmatprep.subr.bf16.mxu0 0
        %910 = vmatpush1.bf16.msra.mxu0 %v848
        %911 = vmatprep.subr.bf16.mxu0 0
        %912 = vmatpush1.bf16.msra.mxu0 %v851
        %913 = vmatprep.subr.bf16.mxu0 0
        %914 = vmatpush1.bf16.msra.mxu0 %v854
        %915 = vmatprep.subr.bf16.mxu0 0
        %916 = vmatpush1.bf16.msra.mxu0 %v857
        %917 = vmatprep.subr.bf16.mxu0 0
        %918 = vmatpush1.bf16.msra.mxu0 %v860
        %919 = vmatprep.subr.bf16.mxu0 0
        %920 = vmatpush1.bf16.msra.mxu0 0
        %921 = vmatprep.subr.bf16.mxu0 0
        %922 = vmatpush1.bf16.msra.mxu0 0
        %923 = vmatprep.subr.bf16.mxu0 0
        %924 = vmatpush1.bf16.msra.mxu0 0
        %925 = vmatprep.subr.bf16.mxu0 0
        %926 = vmatpush1.bf16.msra.mxu0 0
        %927 = vmatprep.subr.bf16.mxu0 0
        %928 = vmatpush1.bf16.msra.mxu0 0
        %929 = vmatprep.subr.bf16.mxu0 0
        %930 = vmatpush1.bf16.msra.mxu0 0
        %931 = vmatprep.subr.bf16.mxu0 0
        %932 = vmatpush1.bf16.msra.mxu0 0
        %933 = vmatprep.subr.bf16.mxu0 0
        %934 = vmatpush1.bf16.msra.mxu0 0
        %935 = vmatprep.mubr.bf16.mxu0 0
        %936 = vmatmul.mubr.bf16.gmra.mrb[0].mxu0 %v895
        %v937 = vpop.f32.mrb[0].mxu0
        %v938 = vadd.f32 0.0, %v937
        %v939 = vpop.f32.mrb[0].mxu0
        %v940 = vpop.f32.mrb[0].mxu0
        %v941 = vadd.f32 0.0, %v940
        %v942 = vpop.f32.mrb[0].mxu0
        %943 = vmatprep.mubr.bf16.mxu0 0
        %944 = vmatmul.mubr.bf16.gmra.mrb[0].mxu0 %v896
        %v945 = vpop.f32.mrb[0].mxu0
        %v946 = vadd.f32 0.0, %v945
        %v947 = vpop.f32.mrb[0].mxu0
        %v948 = vpop.f32.mrb[0].mxu0
        %v949 = vadd.f32 0.0, %v948
        %v950 = vpop.f32.mrb[0].mxu0
        %951 = vmatprep.mubr.bf16.mxu0 0
        %952 = vmatmul.mubr.bf16.gmra.mrb[0].mxu0 %v897
        %v953 = vpop.f32.mrb[0].mxu0
        %v954 = vadd.f32 0.0, %v953
        %v955 = vpop.f32.mrb[0].mxu0
        %v956 = vpop.f32.mrb[0].mxu0
        %v957 = vadd.f32 0.0, %v956
        %v958 = vpop.f32.mrb[0].mxu0
        %959 = vmatprep.mubr.bf16.mxu0 0
        %960 = vmatmul.mubr.bf16.gmra.mrb[0].mxu0 %v898
        %v961 = vpop.f32.mrb[0].mxu0
        %v962 = vadd.f32 0.0, %v961
        %v963 = vpop.f32.mrb[0].mxu0
        %v964 = vpop.f32.mrb[0].mxu0
        %v965 = vadd.f32 0.0, %v964
        %v966 = vpop.f32.mrb[0].mxu0
        %967 = vdwg.mxu0
        %v976 = vunpack.c.l.b16 %v862
        %v977 = vunpack.c.l.b16 %v863
        %v978 = vunpack.c.l.b16 %v864
        %v979 = vunpack.c.l.b16 %v865
        %v980 = vunpack.c.l.b16 %v866
        %v981 = vunpack.c.l.b16 %v867
        %v982 = vunpack.c.l.b16 %v868
        %v983 = vunpack.c.l.b16 %v869
        %v984 = vpack.c.b16 %v977, %v976
        %v985 = vpack.c.b16 %v979, %v978
        %v986 = vpack.c.b16 %v981, %v980
        %v987 = vpack.c.b16 %v983, %v982
        %992 = vmatprep.subr.bf16.mxu0 0
        %993 = vmatpush1.bf16.msra.mxu0 %v838
        %994 = vmatprep.subr.bf16.mxu0 0
        %995 = vmatpush1.bf16.msra.mxu0 %v841
        %996 = vmatprep.subr.bf16.mxu0 0
        %997 = vmatpush1.bf16.msra.mxu0 %v844
        %998 = vmatprep.subr.bf16.mxu0 0
        %999 = vmatpush1.bf16.msra.mxu0 %v847
        %1000 = vmatprep.subr.bf16.mxu0 0
        %1001 = vmatpush1.bf16.msra.mxu0 %v850
        %1002 = vmatprep.subr.bf16.mxu0 0
        %1003 = vmatpush1.bf16.msra.mxu0 %v853
        %1004 = vmatprep.subr.bf16.mxu0 0
        %1005 = vmatpush1.bf16.msra.mxu0 %v856
        %1006 = vmatprep.subr.bf16.mxu0 0
        %1007 = vmatpush1.bf16.msra.mxu0 %v859
        %1008 = vmatprep.subr.bf16.mxu0 0
        %1009 = vmatpush1.bf16.msra.mxu0 0
        %1010 = vmatprep.subr.bf16.mxu0 0
        %1011 = vmatpush1.bf16.msra.mxu0 0
        %1012 = vmatprep.subr.bf16.mxu0 0
        %1013 = vmatpush1.bf16.msra.mxu0 0
        %1014 = vmatprep.subr.bf16.mxu0 0
        %1015 = vmatpush1.bf16.msra.mxu0 0
        %1016 = vmatprep.subr.bf16.mxu0 0
        %1017 = vmatpush1.bf16.msra.mxu0 0
        %1018 = vmatprep.subr.bf16.mxu0 0
        %1019 = vmatpush1.bf16.msra.mxu0 0
        %1020 = vmatprep.subr.bf16.mxu0 0
        %1021 = vmatpush1.bf16.msra.mxu0 0
        %1022 = vmatprep.subr.bf16.mxu0 0
        %1023 = vmatpush1.bf16.msra.mxu0 0
        %1024 = vmatprep.mubr.bf16.mxu0 0
        %1025 = vmatmul.mubr.bf16.gmra.mrb[0].mxu0 %v984
        %v1026 = vpop.f32.mrb[0].mxu0
        %v1027 = vadd.f32 %v938, %v1026
        %v1028 = vpop.f32.mrb[0].mxu0
        %v1029 = vpop.f32.mrb[0].mxu0
        %v1030 = vadd.f32 %v941, %v1029
        %v1031 = vpop.f32.mrb[0].mxu0
        %1032 = vmatprep.mubr.bf16.mxu0 0
        %1033 = vmatmul.mubr.bf16.gmra.mrb[0].mxu0 %v985
        %v1034 = vpop.f32.mrb[0].mxu0
        %v1035 = vadd.f32 %v946, %v1034
        %v1036 = vpop.f32.mrb[0].mxu0
        %v1037 = vpop.f32.mrb[0].mxu0
        %v1038 = vadd.f32 %v949, %v1037
        %v1039 = vpop.f32.mrb[0].mxu0
        %1040 = vmatprep.mubr.bf16.mxu0 0
        %1041 = vmatmul.mubr.bf16.gmra.mrb[0].mxu0 %v986
        %v1042 = vpop.f32.mrb[0].mxu0
        %v1043 = vadd.f32 %v954, %v1042
        %v1044 = vpop.f32.mrb[0].mxu0
        %v1045 = vpop.f32.mrb[0].mxu0
        %v1046 = vadd.f32 %v957, %v1045
        %v1047 = vpop.f32.mrb[0].mxu0
        %1048 = vmatprep.mubr.bf16.mxu0 0
        %1049 = vmatmul.mubr.bf16.gmra.mrb[0].mxu0 %v987
        %v1050 = vpop.f32.mrb[0].mxu0
        %v1051 = vadd.f32 %v962, %v1050
        %v1052 = vpop.f32.mrb[0].mxu0
        %v1053 = vpop.f32.mrb[0].mxu0
        %v1054 = vadd.f32 %v965, %v1053
        %v1055 = vpop.f32.mrb[0].mxu0
        %1056 = vdwg.mxu0
        %s1057 = scalar_lea.vmem %s344, 64 [#allocation3]
        %v1058 = vld [vmem:[%s1057] sm:$0xf]
        %v1059 = vld [vmem:[%s1057 + $0x4] sm:$0xf]
        %v1060 = vld [vmem:[%s1057 + $0x8] sm:$0xf]
        %v1061 = vld [vmem:[%s1057 + $0xc] sm:$0xf]
        %v1062 = vld [vmem:[%s1057 + $0x10] sm:$0xf]
        %v1063 = vld [vmem:[%s1057 + $0x14] sm:$0xf]
        %v1064 = vld [vmem:[%s1057 + $0x18] sm:$0xf]
        %v1065 = vld [vmem:[%s1057 + $0x1c] sm:$0xf]
        %v1074 = vunpack.c.l.b16 %v1058
        %v1075 = vunpack.c.l.b16 %v1059
        %v1076 = vunpack.c.l.b16 %v1060
        %v1077 = vunpack.c.l.b16 %v1061
        %v1078 = vunpack.c.l.b16 %v1062
        %v1079 = vunpack.c.l.b16 %v1063
        %v1080 = vunpack.c.l.b16 %v1064
        %v1081 = vunpack.c.l.b16 %v1065
        %v1082 = vpack.c.b16 %v1075, %v1074
        %v1083 = vpack.c.b16 %v1077, %v1076
        %v1084 = vpack.c.b16 %v1079, %v1078
        %v1085 = vpack.c.b16 %v1081, %v1080
        %1090 = vmatprep.subr.bf16.mxu0 0
        %1091 = vmatpush1.bf16.msra.mxu0 %v840
        %1092 = vmatprep.subr.bf16.mxu0 0
        %1093 = vmatpush1.bf16.msra.mxu0 %v843
        %1094 = vmatprep.subr.bf16.mxu0 0
        %1095 = vmatpush1.bf16.msra.mxu0 %v846
        %1096 = vmatprep.subr.bf16.mxu0 0
        %1097 = vmatpush1.bf16.msra.mxu0 %v849
        %1098 = vmatprep.subr.bf16.mxu0 0
        %1099 = vmatpush1.bf16.msra.mxu0 %v852
        %1100 = vmatprep.subr.bf16.mxu0 0
        %1101 = vmatpush1.bf16.msra.mxu0 %v855
        %1102 = vmatprep.subr.bf16.mxu0 0
        %1103 = vmatpush1.bf16.msra.mxu0 %v858
        %1104 = vmatprep.subr.bf16.mxu0 0
        %1105 = vmatpush1.bf16.msra.mxu0 %v861
        %1106 = vmatprep.subr.bf16.mxu0 0
        %1107 = vmatpush1.bf16.msra.mxu0 0
        %1108 = vmatprep.subr.bf16.mxu0 0
        %1109 = vmatpush1.bf16.msra.mxu0 0
        %1110 = vmatprep.subr.bf16.mxu0 0
        %1111 = vmatpush1.bf16.msra.mxu0 0
        %1112 = vmatprep.subr.bf16.mxu0 0
        %1113 = vmatpush1.bf16.msra.mxu0 0
        %1114 = vmatprep.subr.bf16.mxu0 0
        %1115 = vmatpush1.bf16.msra.mxu0 0
        %1116 = vmatprep.subr.bf16.mxu0 0
        %1117 = vmatpush1.bf16.msra.mxu0 0
        %1118 = vmatprep.subr.bf16.mxu0 0
        %1119 = vmatpush1.bf16.msra.mxu0 0
        %1120 = vmatprep.subr.bf16.mxu0 0
        %1121 = vmatpush1.bf16.msra.mxu0 0
        %1122 = vmatprep.mubr.bf16.mxu0 0
        %1123 = vmatmul.mubr.bf16.gmra.mrb[0].mxu0 %v1082
        %v1124 = vpop.f32.mrb[0].mxu0
        %v1125 = vadd.f32 0.0, %v1124
        %v1126 = vpop.f32.mrb[0].mxu0
        %v1127 = vpop.f32.mrb[0].mxu0
        %v1128 = vadd.f32 0.0, %v1127
        %v1129 = vpop.f32.mrb[0].mxu0
        %1130 = vmatprep.mubr.bf16.mxu0 0
        %1131 = vmatmul.mubr.bf16.gmra.mrb[0].mxu0 %v1083
        %v1132 = vpop.f32.mrb[0].mxu0
        %v1133 = vadd.f32 0.0, %v1132
        %v1134 = vpop.f32.mrb[0].mxu0
        %v1135 = vpop.f32.mrb[0].mxu0
        %v1136 = vadd.f32 0.0, %v1135
        %v1137 = vpop.f32.mrb[0].mxu0
        %1138 = vmatprep.mubr.bf16.mxu0 0
        %1139 = vmatmul.mubr.bf16.gmra.mrb[0].mxu0 %v1084
        %v1140 = vpop.f32.mrb[0].mxu0
        %v1141 = vadd.f32 0.0, %v1140
        %v1142 = vpop.f32.mrb[0].mxu0
        %v1143 = vpop.f32.mrb[0].mxu0
        %v1144 = vadd.f32 0.0, %v1143
        %v1145 = vpop.f32.mrb[0].mxu0
        %1146 = vmatprep.mubr.bf16.mxu0 0
        %1147 = vmatmul.mubr.bf16.gmra.mrb[0].mxu0 %v1085
        %v1148 = vpop.f32.mrb[0].mxu0
        %v1149 = vadd.f32 0.0, %v1148
        %v1150 = vpop.f32.mrb[0].mxu0
        %v1151 = vpop.f32.mrb[0].mxu0
        %v1152 = vadd.f32 0.0, %v1151
        %v1153 = vpop.f32.mrb[0].mxu0
        %1154 = vdwg.mxu0
        %v1155 = vadd.f32 %v1027, %v1125
        %v1156 = vadd.f32 %v1030, %v1128
        %v1157 = vadd.f32 %v1035, %v1133
        %v1158 = vadd.f32 %v1038, %v1136
        %v1159 = vadd.f32 %v1043, %v1141
        %v1160 = vadd.f32 %v1046, %v1144
        %v1161 = vadd.f32 %v1051, %v1149
        %v1162 = vadd.f32 %v1054, %v1152
        %p1163 = scmp.eq.s32.totalorder %s30, 0
        // Predicated region
        $region65: #{tpu_custom_call.1} parent=43 // pred_check
          %p1164 = pneg %p1163
        $region66: #{tpu_custom_call.1} parent=43 // pred_check_branch
          %1166 = sbr.rel (%p1164) target = $region68
        $region67: #{tpu_custom_call.1} parent=43 // pred_region
          %v1167 = vld [vmem:[%s357] sm:$0xf]
          %v1168 = vld [vmem:[%s357 + $0x4] sm:$0xf]
          %v1169 = vld [vmem:[%s357 + $0x8] sm:$0xf]
          %v1170 = vld [vmem:[%s357 + $0xc] sm:$0xf]
          %v1171 = vld [vmem:[%s357 + $0x10] sm:$0xf]
          %v1172 = vld [vmem:[%s357 + $0x14] sm:$0xf]
          %v1173 = vld [vmem:[%s357 + $0x18] sm:$0xf]
          %v1174 = vld [vmem:[%s357 + $0x1c] sm:$0xf]
          %v1175 = vld [vmem:[#allocation10] sm:$0xf]
          %v1176 = vld [vmem:[#allocation10 + $0x4] sm:$0xf]
          %v1177 = vld [vmem:[#allocation10 + $0x8] sm:$0xf]
          %v1178 = vld [vmem:[#allocation10 + $0xc] sm:$0xf]
          %v1179 = vld [vmem:[#allocation10 + $0x10] sm:$0xf]
          %v1180 = vld [vmem:[#allocation10 + $0x14] sm:$0xf]
          %v1181 = vld [vmem:[#allocation10 + $0x18] sm:$0xf]
          %v1182 = vld [vmem:[#allocation10 + $0x1c] sm:$0xf]
          %v1183 = vld [vmem:[#allocation10 + $0x20] sm:$0xf]
          %v1184 = vld [vmem:[#allocation10 + $0x24] sm:$0xf]
          %v1185 = vld [vmem:[#allocation10 + $0x28] sm:$0xf]
          %v1186 = vld [vmem:[#allocation10 + $0x2c] sm:$0xf]
          %v1187 = vld [vmem:[#allocation10 + $0x30] sm:$0xf]
          %v1188 = vld [vmem:[#allocation10 + $0x34] sm:$0xf]
          %v1189 = vld [vmem:[#allocation10 + $0x38] sm:$0xf]
          %v1190 = vld [vmem:[#allocation10 + $0x3c] sm:$0xf]
          %v1191 = vld [vmem:[%s5] sm:$0x1]
          %v1193 = vlaneseq
          %v1194 = vshrl.u32 %v1193, 7
          %v1195 = vsub.s32 0, %v1194
          %v1196 = vrot.slane %v1191, %v1195
          %v1206 = vunpack.c.l.b16 %v1167
          %v1207 = vunpack.c.l.b16 %v1168
          %v1208 = vunpack.c.l.b16 %v1169
          %v1209 = vunpack.c.l.b16 %v1170
          %v1210 = vunpack.c.l.b16 %v1171
          %v1211 = vunpack.c.l.b16 %v1172
          %v1212 = vunpack.c.l.b16 %v1173
          %v1213 = vunpack.c.l.b16 %v1174
          %v1214 = vpack.c.b16 %v1207, %v1206
          %v1215 = vpack.c.b16 %v1209, %v1208
          %v1216 = vpack.c.b16 %v1211, %v1210
          %v1217 = vpack.c.b16 %v1213, %v1212
          %v1238 = vunpack.c.l.b16 %v1175
          %v1239 = vunpack.c.l.b16 %v1176
          %v1240 = vunpack.c.l.b16 %v1177
          %v1241 = vunpack.c.l.b16 %v1178
          %v1242 = vunpack.c.l.b16 %v1179
          %v1243 = vunpack.c.l.b16 %v1180
          %v1244 = vunpack.c.l.b16 %v1181
          %v1245 = vunpack.c.l.b16 %v1182
          %v1246 = vunpack.c.l.b16 %v1183
          %v1247 = vunpack.c.l.b16 %v1184
          %v1248 = vunpack.c.l.b16 %v1185
          %v1249 = vunpack.c.l.b16 %v1186
          %v1250 = vunpack.c.l.b16 %v1187
          %v1251 = vunpack.c.l.b16 %v1188
          %v1252 = vunpack.c.l.b16 %v1189
          %v1253 = vunpack.c.l.b16 %v1190
          %v1254 = vpack.c.b16 %v1239, %v1238
          %v1255 = vpack.c.b16 %v1241, %v1240
          %v1256 = vpack.c.b16 %v1243, %v1242
          %v1257 = vpack.c.b16 %v1245, %v1244
          %v1258 = vpack.c.b16 %v1247, %v1246
          %v1259 = vpack.c.b16 %v1249, %v1248
          %v1260 = vpack.c.b16 %v1251, %v1250
          %v1261 = vpack.c.b16 %v1253, %v1252
          %1270 = vmatprep.subr.bf16.mxu0 0
          %1271 = vmatpush1.bf16.msra.mxu0 %v1254
          %1272 = vmatprep.subr.bf16.mxu0 0
          %1273 = vmatpush1.bf16.msra.mxu0 %v1255
          %1274 = vmatprep.subr.bf16.mxu0 0
          %1275 = vmatpush1.bf16.msra.mxu0 %v1256
          %1276 = vmatprep.subr.bf16.mxu0 0
          %1277 = vmatpush1.bf16.msra.mxu0 %v1257
          %1278 = vmatprep.subr.bf16.mxu0 0
          %1279 = vmatpush1.bf16.msra.mxu0 %v1258
          %1280 = vmatprep.subr.bf16.mxu0 0
          %1281 = vmatpush1.bf16.msra.mxu0 %v1259
          %1282 = vmatprep.subr.bf16.mxu0 0
          %1283 = vmatpush1.bf16.msra.mxu0 %v1260
          %1284 = vmatprep.subr.bf16.mxu0 0
          %1285 = vmatpush1.bf16.msra.mxu0 %v1261
          %1286 = vmatprep.subr.bf16.mxu0 0
          %1287 = vmatpush1.bf16.msra.mxu0 0
          %1288 = vmatprep.subr.bf16.mxu0 0
          %1289 = vmatpush1.bf16.msra.mxu0 0
          %1290 = vmatprep.subr.bf16.mxu0 0
          %1291 = vmatpush1.bf16.msra.mxu0 0
          %1292 = vmatprep.subr.bf16.mxu0 0
          %1293 = vmatpush1.bf16.msra.mxu0 0
          %1294 = vmatprep.subr.bf16.mxu0 0
          %1295 = vmatpush1.bf16.msra.mxu0 0
          %1296 = vmatprep.subr.bf16.mxu0 0
          %1297 = vmatpush1.bf16.msra.mxu0 0
          %1298 = vmatprep.subr.bf16.mxu0 0
          %1299 = vmatpush1.bf16.msra.mxu0 0
          %1300 = vmatprep.subr.bf16.mxu0 0
          %1301 = vmatpush1.bf16.msra.mxu0 0
          %1302 = vmatprep.mubr.bf16.mxu0 0
          %1303 = vmatmul.mubr.bf16.gmra.mrb[0].mxu0 %v1214
          %v1304 = vpop.f32.mrb[0].mxu0
          %v1305 = vadd.f32 %v1196, %v1304
          %v1306 = vpop.f32.mrb[0].mxu0
          %v1307 = vpop.f32.mrb[0].mxu0
          %v1308 = vadd.f32 %v1196, %v1307
          %v1309 = vpop.f32.mrb[0].mxu0
          %1310 = vmatprep.mubr.bf16.mxu0 0
          %1311 = vmatmul.mubr.bf16.gmra.mrb[0].mxu0 %v1215
          %v1312 = vpop.f32.mrb[0].mxu0
          %v1313 = vadd.f32 %v1196, %v1312
          %v1314 = vpop.f32.mrb[0].mxu0
          %v1315 = vpop.f32.mrb[0].mxu0
          %v1316 = vadd.f32 %v1196, %v1315
          %v1317 = vpop.f32.mrb[0].mxu0
          %1318 = vmatprep.mubr.bf16.mxu0 0
          %1319 = vmatmul.mubr.bf16.gmra.mrb[0].mxu0 %v1216
          %v1320 = vpop.f32.mrb[0].mxu0
          %v1321 = vadd.f32 %v1196, %v1320
          %v1322 = vpop.f32.mrb[0].mxu0
          %v1323 = vpop.f32.mrb[0].mxu0
          %v1324 = vadd.f32 %v1196, %v1323
          %v1325 = vpop.f32.mrb[0].mxu0
          %1326 = vmatprep.mubr.bf16.mxu0 0
          %1327 = vmatmul.mubr.bf16.gmra.mrb[0].mxu0 %v1217
          %v1328 = vpop.f32.mrb[0].mxu0
          %v1329 = vadd.f32 %v1196, %v1328
          %v1330 = vpop.f32.mrb[0].mxu0
          %v1331 = vpop.f32.mrb[0].mxu0
          %v1332 = vadd.f32 %v1196, %v1331
          %v1333 = vpop.f32.mrb[0].mxu0
          %1334 = vdwg.mxu0
          %v1335 = vadd.f32 %v1305, %v1155
          %v1336 = vadd.f32 %v1308, %v1156
          %v1337 = vadd.f32 %v1313, %v1157
          %v1338 = vadd.f32 %v1316, %v1158
          %v1339 = vadd.f32 %v1321, %v1159
          %v1340 = vadd.f32 %v1324, %v1160
          %v1341 = vadd.f32 %v1329, %v1161
          %v1342 = vadd.f32 %v1332, %v1162
          %1343 = vst [vmem:[#allocation2] sm:$0xff] %v1335
          %1344 = vst [vmem:[#allocation2 + $0x8] sm:$0xff] %v1336
          %1345 = vst [vmem:[#allocation2 + $0x10] sm:$0xff] %v1337
          %1346 = vst [vmem:[#allocation2 + $0x18] sm:$0xff] %v1338
          %1347 = vst [vmem:[#allocation2 + $0x20] sm:$0xff] %v1339
          %1348 = vst [vmem:[#allocation2 + $0x28] sm:$0xff] %v1340
          %1349 = vst [vmem:[#allocation2 + $0x30] sm:$0xff] %v1341
          %1350 = vst [vmem:[#allocation2 + $0x38] sm:$0xff] %v1342
        $region68: #{tpu_custom_call.1} parent=43 // pred_fallthru
          _
        %p1351 = scmp.gt.s32.totalorder %s30, 0
        // Predicated region
        $region69: #{tpu_custom_call.1} parent=43 // pred_check
          %p1352 = pneg %p1351
        $region70: #{tpu_custom_call.1} parent=43 // pred_check_branch
          %1354 = sbr.rel (%p1352) target = $region72
        $region71: #{tpu_custom_call.1} parent=43 // pred_region
          %v1355 = vld [vmem:[#allocation2] sm:$0xff]
          %v1356 = vld [vmem:[#allocation2 + $0x8] sm:$0xff]
          %v1357 = vld [vmem:[#allocation2 + $0x10] sm:$0xff]
          %v1358 = vld [vmem:[#allocation2 + $0x18] sm:$0xff]
          %v1359 = vld [vmem:[#allocation2 + $0x20] sm:$0xff]
          %v1360 = vld [vmem:[#allocation2 + $0x28] sm:$0xff]
          %v1361 = vld [vmem:[#allocation2 + $0x30] sm:$0xff]
          %v1362 = vld [vmem:[#allocation2 + $0x38] sm:$0xff]
          %v1363 = vadd.f32 %v1355, %v1155
          %v1364 = vadd.f32 %v1356, %v1156
          %v1365 = vadd.f32 %v1357, %v1157
          %v1366 = vadd.f32 %v1358, %v1158
          %v1367 = vadd.f32 %v1359, %v1159
          %v1368 = vadd.f32 %v1360, %v1160
          %v1369 = vadd.f32 %v1361, %v1161
          %v1370 = vadd.f32 %v1362, %v1162
          %1371 = vst [vmem:[#allocation2] sm:$0xff] %v1363
          %1372 = vst [vmem:[#allocation2 + $0x8] sm:$0xff] %v1364
          %1373 = vst [vmem:[#allocation2 + $0x10] sm:$0xff] %v1365
          %1374 = vst [vmem:[#allocation2 + $0x18] sm:$0xff] %v1366
          %1375 = vst [vmem:[#allocation2 + $0x20] sm:$0xff] %v1367
          %1376 = vst [vmem:[#allocation2 + $0x28] sm:$0xff] %v1368
          %1377 = vst [vmem:[#allocation2 + $0x30] sm:$0xff] %v1369
          %1378 = vst [vmem:[#allocation2 + $0x38] sm:$0xff] %v1370
        $region72: #{tpu_custom_call.1} parent=43 // pred_fallthru
          _
        // Predicated region
        $region73: #{tpu_custom_call.1} parent=43 // pred_check
          %p1379 = pneg %p1163
        $region74: #{tpu_custom_call.1} parent=43 // pred_check_branch
          %1381 = sbr.rel (%p1379) target = $region76
        $region75: #{tpu_custom_call.1} parent=43 // pred_region
          %v1382 = vld [vmem:[#allocation2] sm:$0xff]
          %v1383 = vld [vmem:[#allocation2 + $0x8] sm:$0xff]
          %v1384 = vld [vmem:[#allocation2 + $0x10] sm:$0xff]
          %v1385 = vld [vmem:[#allocation2 + $0x18] sm:$0xff]
          %v1386 = vld [vmem:[#allocation2 + $0x20] sm:$0xff]
          %v1387 = vld [vmem:[#allocation2 + $0x28] sm:$0xff]
          %v1388 = vld [vmem:[#allocation2 + $0x30] sm:$0xff]
          %v1389 = vld [vmem:[#allocation2 + $0x38] sm:$0xff]
          %v1390 = vmax.f32 %v1382, 0.0
          %v1391 = vmax.f32 %v1383, 0.0
          %v1392 = vmax.f32 %v1384, 0.0
          %v1393 = vmax.f32 %v1385, 0.0
          %v1394 = vmax.f32 %v1386, 0.0
          %v1395 = vmax.f32 %v1387, 0.0
          %v1396 = vmax.f32 %v1388, 0.0
          %v1397 = vmax.f32 %v1389, 0.0
          %v1398 = vpack.c.bf16 %v1391, %v1390
          %v1399 = vpack.c.bf16 %v1393, %v1392
          %v1400 = vpack.c.bf16 %v1395, %v1394
          %v1401 = vpack.c.bf16 %v1397, %v1396
          %v1406 = vunpack.c.l.b16 %v1398
          %v1407 = vunpack.c.h.b16 %v1398
          %v1408 = vunpack.c.l.b16 %v1399
          %v1409 = vunpack.c.h.b16 %v1399
          %v1410 = vunpack.c.l.b16 %v1400
          %v1411 = vunpack.c.h.b16 %v1400
          %v1412 = vunpack.c.l.b16 %v1401
          %v1413 = vunpack.c.h.b16 %v1401
          %v1414 = vpack.c.b16 %v1406, %v1406
          %v1415 = vpack.c.b16 %v1407, %v1407
          %v1416 = vpack.c.b16 %v1408, %v1408
          %v1417 = vpack.c.b16 %v1409, %v1409
          %v1418 = vpack.c.b16 %v1410, %v1410
          %v1419 = vpack.c.b16 %v1411, %v1411
          %v1420 = vpack.c.b16 %v1412, %v1412
          %v1421 = vpack.c.b16 %v1413, %v1413
          %1430 = vst [vmem:[%s398] sm:$0xf] %v1414
          %1431 = vst [vmem:[%s398 + $0x4] sm:$0xf] %v1415
          %1432 = vst [vmem:[%s398 + $0x8] sm:$0xf] %v1416
          %1433 = vst [vmem:[%s398 + $0xc] sm:$0xf] %v1417
          %1434 = vst [vmem:[%s398 + $0x10] sm:$0xf] %v1418
          %1435 = vst [vmem:[%s398 + $0x14] sm:$0xf] %v1419
          %1436 = vst [vmem:[%s398 + $0x18] sm:$0xf] %v1420
          %1437 = vst [vmem:[%s398 + $0x1c] sm:$0xf] %v1421
        $region76: #{tpu_custom_call.1} parent=43 // pred_fallthru
          _
        %s1438 = sand.u32 %s188, 1
        %s1439 = scalar_lea.sflag [#allocation5], %s1438
        %s1440 = sand.u32 %s188, 1
        %s1441 = smul.addr %s1440, 32
        %s1442 = scalar_lea.vmem [#allocation12], %s1441
        // Predicated region
        $region77: #{tpu_custom_call.1} parent=43 // pred_check
          %p1443 = pneg %p198
        $region78: #{tpu_custom_call.1} parent=43 // pred_check_branch
          %1445 = sbr.rel (%p1443) target = $region80
        $region79: #{tpu_custom_call.1} parent=43 // pred_region
          %s1446 = smul.u32 8, %s29
          %s1448 = ssub.s32 512, 512
          %1449 = vsyncadd %s1439, %s1448
          %s1450 = smul.addr %s1446, 64
          %s1451 = scalar_lea.hbm %s6, %s1450
          %s1452 = sshll.u32 %s1442, 4
          %s1453 = int_to_ptr.vmem [resolvable:$true] %s1452
          %1458 = dma.vmem_to_hbm [thread:$0]  %s1453, 512, %s1451, %s1439, 64, 64, 4
        $region80: #{tpu_custom_call.1} parent=43 // pred_fallthru
          _
      $region44: #{tpu_custom_call.1} parent=5 // pred_fallthru
        _
      %p1459 = scmp.le.s32.totalorder 2, %s20
      // Predicated region
      $region81: #{tpu_custom_call.1} parent=5 // pred_check
        %p1460 = pneg %p1459
      $region82: #{tpu_custom_call.1} parent=5 // pred_check_branch
        %1462 = sbr.rel (%p1460) target = $region84
      $region83: #{tpu_custom_call.1} parent=5 // pred_region
        %s1463 = ssub.s32 %s20, 2
        // Predicated region
        $region85: #{tpu_custom_call.1} parent=83 // pred_check
          %p1464 = pneg %p204
        $region86: #{tpu_custom_call.1} parent=83 // pred_check_branch
          %1466 = sbr.rel (%p1464) target = $region88
        $region87: #{tpu_custom_call.1} parent=83 // pred_region
          %s1467 = sand.u32 %s189, 1
          %s1468 = scalar_lea.sflag [#allocation5], %s1467
          %s1469 = sand.u32 %s189, 1
          %s1470 = smul.addr %s1469, 32
          %s1471 = scalar_lea.vmem [#allocation12], %s1470
          %1472 = dma.done %s1468, 512
        $region88: #{tpu_custom_call.1} parent=83 // pred_fallthru
          _
      $region84: #{tpu_custom_call.1} parent=5 // pred_fallthru
        _
    $region6: #{tpu_custom_call.1} parent=1 // loop_footer
      %s24 = sadd.s32 1, %s20
    $region7: #{tpu_custom_call.1} parent=1 // loop_footer_branch
      %19 = sbr.rel target = $region3
    $region8: #{tpu_custom_call.1} parent=1 // loop_exit
      _
    %1473 = vsyncpa [#allocation4], 1
    %s1474 = scalar_lea.sflag [#allocation4], 1
    %1475 = vsyncpa %s1474, 1
    %1476 = vsyncpa [#allocation7], 1
    %1477 = vsyncpa [#allocation11], 1
    %1478 = vsyncpa [#allocation5], 1
    %s1479 = scalar_lea.sflag [#allocation5], 1
    %1480 = vsyncpa %s1479, 1

</llo_original>
